<compile_context>
chip_gen: v7x
topology: tpu7x:2x2x1
jax: 0.10.0
libtpu: 0.0.40
codegen_flags: <defaults>
</compile_context>

<pallas_src>
import functools

import jax
import jax.numpy as jnp
from jax.experimental import pallas as pl
from jax.experimental.pallas import tpu as pltpu


def dqn_mlp_kernel(x_ref,
                   w1_ref, b1_ref,
                   w2_ref, b2_ref,
                   w3_ref, b3_ref,
                   w4_ref, b4_ref,
                   o_ref,
                   *, bf16_compute, approx_sigmoid):
    """One (TB, 18) batch tile of the full forward pass.

    w4_ref / b4_ref hold the softmax-folded head: column 0 = (l0 - l1) weights,
    column 1 = (l1 - l0) weights, so the final softmax is an element-wise
    sigmoid of the 2-wide logit-difference block (no cross-lane reductions).
    """
    x = x_ref[...]
    if bf16_compute:
        # Free in-kernel cast (VPU): makes every dot a native bf16 MXU matmul.
        x = x.astype(jnp.bfloat16)

    def layer(h, w_ref, b_ref):
        h = jnp.dot(h, w_ref[...], preferred_element_type=jnp.float32) + b_ref[...]
        h = jnp.maximum(h, 0.0)                     # bias add + ReLU stay f32
        if bf16_compute:
            h = h.astype(jnp.bfloat16)              # next dot is bf16 x bf16
        return h

    h = layer(x, w1_ref, b1_ref)
    h = layer(h, w2_ref, b2_ref)
    h = layer(h, w3_ref, b3_ref)

    d = jnp.dot(h, w4_ref[...], preferred_element_type=jnp.float32) + b4_ref[...]
    if approx_sigmoid:
        # exp rides the EUP slot; approx reciprocal stays on the EUP slot too.
        # Clamp so exp never produces inf before the approx rcp.
        e = jnp.exp(jnp.minimum(-d, 30.0))
        p = pl.reciprocal(1.0 + e, approx=True)
    else:
        # Strict path: exact divide keeps the 1e-4 match with the reference.
        p = 1.0 / (1.0 + jnp.exp(-d))
    o_ref[...] = p.astype(o_ref.dtype)


def _round_up(n, m):
    return (n + m - 1) // m * m


@functools.partial(jax.jit,
                   static_argnames=("tile_batch", "use_bf16_compute", "approx_sigmoid"))
def dqn_forward(x, params, *, tile_batch=4096, use_bf16_compute=False,
                approx_sigmoid=None):
    """Batched forward pass. x: (B, 18) float32 (or bf16). Returns (B, 2) f32 probs."""
    if approx_sigmoid is None:
        approx_sigmoid = use_bf16_compute

    (w1, b1), (w2, b2), (w3, b3), (w4, b4) = params
    B, in_dim = x.shape

    # Fold the 2-class softmax into a 2-wide logit-difference head:
    #   col 0: w[:,0]-w[:,1], b0-b1  -> sigmoid(l0-l1) = softmax[0]
    #   col 1: w[:,1]-w[:,0], b1-b0  -> sigmoid(l1-l0) = softmax[1]
    w4_eff = jnp.stack([w4[:, 0] - w4[:, 1], w4[:, 1] - w4[:, 0]], axis=1)
    b4_eff = jnp.stack([b4[0, 0] - b4[0, 1], b4[0, 1] - b4[0, 0]]).reshape(1, 2)

    if use_bf16_compute:
        # Casting the tiny weights in the wrapper is fine (one-off, ~35 KiB).
        # Do NOT cast x here: a standalone astype costs more HBM traffic than
        # it saves; the kernel casts the x tile in VMEM instead.
        w1, w2, w3, w4_eff = (w.astype(jnp.bfloat16) for w in (w1, w2, w3, w4_eff))

    # Batch tiling: largest sublane-aligned tile <= tile_batch; keep >= 4 grid
    # steps when the batch is big enough (>= 2 steps per TensorCore on v7x)
    # while each step still amortizes the ~0.35us per-step overhead.
    tb = min(tile_batch, _round_up(B, 8))
    if B >= 4096:
        tb = min(tb, _round_up(pl.cdiv(B, 4), 8))
    tb = max(_round_up(tb, 8), 8)
    padded_b = _round_up(B, tb)
    grid = (padded_b // tb,)

    if padded_b != B:
        x = jnp.pad(x, ((0, padded_b - B), (0, 0)))

    # Scoped-VMEM: double-buffered x/out blocks (lane-padded to 128 in VMEM)
    # plus ~3 lane-padded intermediates, with 2x headroom for Mosaic scratch.
    # Floor of 32 MiB mainly raises v5e's 16 MiB default; cap stays well under
    # v7x's 64 MiB physical VMEM.
    lane_row_bytes = 128 * 4
    est = tb * lane_row_bytes * (2 * 2 + 3)
    vmem_limit = int(min(max(32 << 20, 2 * est), 48 << 20))

    def const_spec(a):
        # Full-array block, same block every grid step -> DMA'd once, VMEM-resident.
        return pl.BlockSpec(a.shape, lambda i: (0,) * a.ndim)

    kernel = functools.partial(dqn_mlp_kernel,
                               bf16_compute=use_bf16_compute,
                               approx_sigmoid=approx_sigmoid)

    out = pl.pallas_call(
        kernel,
        out_shape=jax.ShapeDtypeStruct((padded_b, 2), jnp.float32),
        grid=grid,
        in_specs=[
            pl.BlockSpec((tb, in_dim), lambda i: (i, 0)),
            const_spec(w1), const_spec(b1),
            const_spec(w2), const_spec(b2),
            const_spec(w3), const_spec(b3),
            const_spec(w4_eff), const_spec(b4_eff),
        ],
        # Narrow (tb, 2) block: masked vst in-kernel (store slot has slack) but
        # only 8 B/row of HBM writeback instead of 512 B/row.
        out_specs=pl.BlockSpec((tb, 2), lambda i: (i, 0)),
        compiler_params=pltpu.CompilerParams(
            # Batch tiles are independent. If xprof on v7x shows one idle TC,
            # switch this axis to pltpu.CORE_PARALLEL.
            dimension_semantics=("parallel",),
            vmem_limit_bytes=vmem_limit,
        ),
    )(x, w1, b1, w2, b2, w3, b3, w4_eff, b4_eff)

    # Drop batch padding only; output is already exactly 2 columns.
    return out[:B]


def init_linear(key, in_features, out_features):
    """Deterministic init mimicking nn.Linear's uniform(-1/sqrt(in), 1/sqrt(in)).
    Weight stored as (in_features, out_features); bias as (1, out_features)."""
    kw, kb = jax.random.split(key)
    bound = 1.0 / jnp.sqrt(jnp.float32(in_features))
    w = jax.random.uniform(kw, (in_features, out_features), jnp.float32, -bound, bound)
    b = jax.random.uniform(kb, (1, out_features), jnp.float32, -bound, bound)
    return w, b


def reference_forward(x, params):
    """Pure-JAX reference of the same math (softmax head, high-precision dots)."""
    dot = lambda a, b: jnp.dot(a, b, precision=jax.lax.Precision.HIGHEST)
    (w1, b1), (w2, b2), (w3, b3), (w4, b4) = params
    h = jax.nn.relu(dot(x, w1) + b1)
    h = jax.nn.relu(dot(h, w2) + b2)
    h = jax.nn.relu(dot(h, w3) + b3)
    return jax.nn.softmax(dot(h, w4) + b4, axis=-1)


if __name__ == "__main__":
    # Module hyper-params: input = 18, first = 32, second = 64, third = 32, output = 2.
    first_layer, second_layer, third_layer = 32, 64, 32
    batch = 1000          # several batch tiles so the grid/pipeline is exercised
    tile_batch = 256      # -> padded B = 1024, grid = (4,)

    key = jax.random.PRNGKey(0)
    kx, k1, k2, k3, k4 = jax.random.split(key, 5)

    x = jax.random.normal(kx, (batch, 18), jnp.float32)
    params = (
        init_linear(k1, 18, first_layer),
        init_linear(k2, first_layer, second_layer),
        init_linear(k3, second_layer, third_layer),
        init_linear(k4, third_layer, 2),
    )

    ref = reference_forward(x, params)

    # Strict f32 path: must match the PyTorch-equivalent reference tightly.
    out = jax.block_until_ready(dqn_forward(x, params, tile_batch=tile_batch))
    assert out.shape == (batch, 2)
    assert jnp.allclose(out, ref, atol=1e-4, rtol=1e-4), "Pallas output mismatch (f32)"
    assert jnp.allclose(jnp.sum(out, axis=-1), 1.0, atol=1e-4), "softmax rows must sum to 1"

    # bf16-compute fast path (v6e/v7x): bf16 MXU dots + approx-rcp sigmoid.
    out_fast = jax.block_until_ready(
        dqn_forward(x, params, tile_batch=tile_batch, use_bf16_compute=True))
    assert out_fast.shape == (batch, 2)
    assert jnp.allclose(out_fast, ref, atol=5e-2), "Pallas output mismatch (bf16 compute)"

    print("KERNEL_OK")
</pallas_src>

<mosaic_0001>
module attributes {stable_mosaic.version = 11 : i64} {
  func.func @dqn_mlp_kernel(%arg0: i32, %arg1: memref<256x18xf32, #tpu.memory_space<vmem>>, %arg2: memref<18x32xf32, #tpu.memory_space<vmem>>, %arg3: memref<1x32xf32, #tpu.memory_space<vmem>>, %arg4: memref<32x64xf32, #tpu.memory_space<vmem>>, %arg5: memref<1x64xf32, #tpu.memory_space<vmem>>, %arg6: memref<64x32xf32, #tpu.memory_space<vmem>>, %arg7: memref<1x32xf32, #tpu.memory_space<vmem>>, %arg8: memref<32x2xf32, #tpu.memory_space<vmem>>, %arg9: memref<1x2xf32, #tpu.memory_space<vmem>>, %arg10: memref<256x2xf32, #tpu.memory_space<vmem>>) attributes {dimension_semantics = [#tpu.dimension_semantics<parallel>], iteration_bounds = array<i64: 4>, scalar_prefetch = 0 : i64, scratch_operands = 0 : i64, tpu.core_type = #tpu.core_type<tc>, window_params = [{transform_indices = @transform_0, window_bounds = array<i64: 256, 18>}, {pipeline_mode = #tpu.pipeline_mode<synchronous>, transform_indices = @transform_1, window_bounds = array<i64: 18, 32>}, {pipeline_mode = #tpu.pipeline_mode<synchronous>, transform_indices = @transform_2, window_bounds = array<i64: 1, 32>}, {pipeline_mode = #tpu.pipeline_mode<synchronous>, transform_indices = @transform_3, window_bounds = array<i64: 32, 64>}, {pipeline_mode = #tpu.pipeline_mode<synchronous>, transform_indices = @transform_4, window_bounds = array<i64: 1, 64>}, {pipeline_mode = #tpu.pipeline_mode<synchronous>, transform_indices = @transform_5, window_bounds = array<i64: 64, 32>}, {pipeline_mode = #tpu.pipeline_mode<synchronous>, transform_indices = @transform_6, window_bounds = array<i64: 1, 32>}, {pipeline_mode = #tpu.pipeline_mode<synchronous>, transform_indices = @transform_7, window_bounds = array<i64: 32, 2>}, {pipeline_mode = #tpu.pipeline_mode<synchronous>, transform_indices = @transform_8, window_bounds = array<i64: 1, 2>}, {transform_indices = @transform_9, window_bounds = array<i64: 256, 2>}]} {
    %c0 = arith.constant 0 : index
    %c0_0 = arith.constant 0 : index
    %0 = vector.load %arg1[%c0, %c0_0] : memref<256x18xf32, #tpu.memory_space<vmem>>, vector<256x18xf32>
    %c0_1 = arith.constant 0 : index
    %c0_2 = arith.constant 0 : index
    %1 = vector.load %arg2[%c0_1, %c0_2] : memref<18x32xf32, #tpu.memory_space<vmem>>, vector<18x32xf32>
    %cst = arith.constant dense<0.000000e+00> : vector<256x32xf32>
    %2 = tpu.matmul %0, %1, %cst {dimension_numbers = #tpu.dot_dimension_numbers<[1], [0], [0], [1], [0, 0, 1, 1], [], []>} : vector<256x18xf32>, vector<18x32xf32>, vector<256x32xf32> -> vector<256x32xf32>
    %c0_3 = arith.constant 0 : index
    %c0_4 = arith.constant 0 : index
    %3 = vector.load %arg3[%c0_3, %c0_4] : memref<1x32xf32, #tpu.memory_space<vmem>>, vector<1x32xf32>
    %4 = vector.broadcast %3 : vector<1x32xf32> to vector<256x32xf32>
    %5 = arith.addf %2, %4 : vector<256x32xf32>
    %cst_5 = arith.constant 0.000000e+00 : f32
    %6 = vector.broadcast %cst_5 : f32 to vector<256x32xf32>
    %7 = arith.maximumf %5, %6 : vector<256x32xf32>
    %c0_6 = arith.constant 0 : index
    %c0_7 = arith.constant 0 : index
    %8 = vector.load %arg4[%c0_6, %c0_7] : memref<32x64xf32, #tpu.memory_space<vmem>>, vector<32x64xf32>
    %cst_8 = arith.constant dense<0.000000e+00> : vector<256x64xf32>
    %9 = tpu.matmul %7, %8, %cst_8 {dimension_numbers = #tpu.dot_dimension_numbers<[1], [0], [0], [1], [0, 0, 1, 1], [], []>} : vector<256x32xf32>, vector<32x64xf32>, vector<256x64xf32> -> vector<256x64xf32>
    %c0_9 = arith.constant 0 : index
    %c0_10 = arith.constant 0 : index
    %10 = vector.load %arg5[%c0_9, %c0_10] : memref<1x64xf32, #tpu.memory_space<vmem>>, vector<1x64xf32>
    %11 = vector.broadcast %10 : vector<1x64xf32> to vector<256x64xf32>
    %12 = arith.addf %9, %11 : vector<256x64xf32>
    %cst_11 = arith.constant 0.000000e+00 : f32
    %13 = vector.broadcast %cst_11 : f32 to vector<256x64xf32>
    %14 = arith.maximumf %12, %13 : vector<256x64xf32>
    %c0_12 = arith.constant 0 : index
    %c0_13 = arith.constant 0 : index
    %15 = vector.load %arg6[%c0_12, %c0_13] : memref<64x32xf32, #tpu.memory_space<vmem>>, vector<64x32xf32>
    %cst_14 = arith.constant dense<0.000000e+00> : vector<256x32xf32>
    %16 = tpu.matmul %14, %15, %cst_14 {dimension_numbers = #tpu.dot_dimension_numbers<[1], [0], [0], [1], [0, 0, 1, 1], [], []>} : vector<256x64xf32>, vector<64x32xf32>, vector<256x32xf32> -> vector<256x32xf32>
    %c0_15 = arith.constant 0 : index
    %c0_16 = arith.constant 0 : index
    %17 = vector.load %arg7[%c0_15, %c0_16] : memref<1x32xf32, #tpu.memory_space<vmem>>, vector<1x32xf32>
    %18 = vector.broadcast %17 : vector<1x32xf32> to vector<256x32xf32>
    %19 = arith.addf %16, %18 : vector<256x32xf32>
    %cst_17 = arith.constant 0.000000e+00 : f32
    %20 = vector.broadcast %cst_17 : f32 to vector<256x32xf32>
    %21 = arith.maximumf %19, %20 : vector<256x32xf32>
    %c0_18 = arith.constant 0 : index
    %c0_19 = arith.constant 0 : index
    %22 = vector.load %arg8[%c0_18, %c0_19] : memref<32x2xf32, #tpu.memory_space<vmem>>, vector<32x2xf32>
    %cst_20 = arith.constant dense<0.000000e+00> : vector<256x2xf32>
    %23 = tpu.matmul %21, %22, %cst_20 {dimension_numbers = #tpu.dot_dimension_numbers<[1], [0], [0], [1], [0, 0, 1, 1], [], []>} : vector<256x32xf32>, vector<32x2xf32>, vector<256x2xf32> -> vector<256x2xf32>
    %c0_21 = arith.constant 0 : index
    %c0_22 = arith.constant 0 : index
    %24 = vector.load %arg9[%c0_21, %c0_22] : memref<1x2xf32, #tpu.memory_space<vmem>>, vector<1x2xf32>
    %25 = vector.broadcast %24 : vector<1x2xf32> to vector<256x2xf32>
    %26 = arith.addf %23, %25 : vector<256x2xf32>
    %cst_23 = arith.constant 0.000000e+00 : f32
    %27 = vector.broadcast %cst_23 : f32 to vector<256x2xf32>
    %28 = arith.subf %27, %26 : vector<256x2xf32>
    %29 = math.exp %28 : vector<256x2xf32>
    %cst_24 = arith.constant 1.000000e+00 : f32
    %30 = vector.broadcast %cst_24 : f32 to vector<256x2xf32>
    %31 = arith.addf %30, %29 : vector<256x2xf32>
    %cst_25 = arith.constant 1.000000e+00 : f32
    %32 = vector.broadcast %cst_25 : f32 to vector<256x2xf32>
    %33 = arith.divf %32, %31 : vector<256x2xf32>
    %c0_26 = arith.constant 0 : index
    %c0_27 = arith.constant 0 : index
    %34 = vector.load %arg10[%c0_26, %c0_27] : memref<256x2xf32, #tpu.memory_space<vmem>>, vector<256x2xf32>
    tpu.vector_store %arg10[%c0_26, %c0_27], %33 {strides = array<i32>} : memref<256x2xf32, #tpu.memory_space<vmem>>, vector<256x2xf32>,
    return
  }
  func.func @transform_0(%arg0: i32) -> (i32, i32) {
    %c0_i32 = arith.constant 0 : i32
    %c0_i32_0 = arith.constant 0 : i32
    return %arg0, %c0_i32 : i32, i32
  }
  func.func @transform_1(%arg0: i32) -> (i32, i32) {
    %c0_i32 = arith.constant 0 : i32
    %c0_i32_0 = arith.constant 0 : i32
    %c0_i32_1 = arith.constant 0 : i32
    return %c0_i32, %c0_i32_0 : i32, i32
  }
  func.func @transform_2(%arg0: i32) -> (i32, i32) {
    %c0_i32 = arith.constant 0 : i32
    %c0_i32_0 = arith.constant 0 : i32
    %c0_i32_1 = arith.constant 0 : i32
    return %c0_i32, %c0_i32_0 : i32, i32
  }
  func.func @transform_3(%arg0: i32) -> (i32, i32) {
    %c0_i32 = arith.constant 0 : i32
    %c0_i32_0 = arith.constant 0 : i32
    %c0_i32_1 = arith.constant 0 : i32
    return %c0_i32, %c0_i32_0 : i32, i32
  }
  func.func @transform_4(%arg0: i32) -> (i32, i32) {
    %c0_i32 = arith.constant 0 : i32
    %c0_i32_0 = arith.constant 0 : i32
    %c0_i32_1 = arith.constant 0 : i32
    return %c0_i32, %c0_i32_0 : i32, i32
  }
  func.func @transform_5(%arg0: i32) -> (i32, i32) {
    %c0_i32 = arith.constant 0 : i32
    %c0_i32_0 = arith.constant 0 : i32
    %c0_i32_1 = arith.constant 0 : i32
    return %c0_i32, %c0_i32_0 : i32, i32
  }
  func.func @transform_6(%arg0: i32) -> (i32, i32) {
    %c0_i32 = arith.constant 0 : i32
    %c0_i32_0 = arith.constant 0 : i32
    %c0_i32_1 = arith.constant 0 : i32
    return %c0_i32, %c0_i32_0 : i32, i32
  }
  func.func @transform_7(%arg0: i32) -> (i32, i32) {
    %c0_i32 = arith.constant 0 : i32
    %c0_i32_0 = arith.constant 0 : i32
    %c0_i32_1 = arith.constant 0 : i32
    return %c0_i32, %c0_i32_0 : i32, i32
  }
  func.func @transform_8(%arg0: i32) -> (i32, i32) {
    %c0_i32 = arith.constant 0 : i32
    %c0_i32_0 = arith.constant 0 : i32
    %c0_i32_1 = arith.constant 0 : i32
    return %c0_i32, %c0_i32_0 : i32, i32
  }
  func.func @transform_9(%arg0: i32) -> (i32, i32) {
    %c0_i32 = arith.constant 0 : i32
    %c0_i32_0 = arith.constant 0 : i32
    return %arg0, %c0_i32 : i32, i32
  }
}

</mosaic_0001>

<llo_original>
// kernel: dqn_forward.1
$region0: #{dqn_forward.1}
  #allocation0 [shape = 'u32[]', space=smem, size = 0x4, offset = 0x4, fixed_abs, tag = 'smem constant byte address 0x4 - core index']
  #allocation1 [shape = 'u32[144,128]{1,0:T(1,128)}', space=vmem, size = 0x12000, scoped, tag = 'internal scratch']
  %s0 = inlined_call_operand.vmem [shape: f32[1024,18], index: 0, kind: input, shape index: {}]
  %s1 = inlined_call_operand.vmem [shape: f32[18,32], index: 1, kind: input, shape index: {}]
  %s2 = inlined_call_operand.vmem [shape: f32[1,32], index: 2, kind: input, shape index: {}]
  %s3 = inlined_call_operand.vmem [shape: f32[32,64], index: 3, kind: input, shape index: {}]
  %s4 = inlined_call_operand.vmem [shape: f32[1,64], index: 4, kind: input, shape index: {}]
  %s5 = inlined_call_operand.vmem [shape: f32[64,32], index: 5, kind: input, shape index: {}]
  %s6 = inlined_call_operand.vmem [shape: f32[1,32], index: 6, kind: input, shape index: {}]
  %s7 = inlined_call_operand.vmem [shape: f32[32,2], index: 7, kind: input, shape index: {}]
  %s8 = inlined_call_operand.vmem [shape: f32[1,2], index: 8, kind: input, shape index: {}]
  %s9 = inlined_call_operand.vmem [shape: f32[1024,2], index: 9, kind: output, shape index: {}]
  %s10 = sld [smem:[#allocation0]]
  $region69: #{dqn_forward.1} parent=0
    _
  %s12 = ssub.s32 1, %s10
  %s13 = scalar_select 0, %s12, %s10
  loop: start=0, step=1, limit=6
  $region2: #{dqn_forward.1} parent=0 // loop_pre_header
    _
  $region3: #{dqn_forward.1} parent=0 // loop_header
    %s15 = sphi 0, %s19
    %p16 = scmp.ge.s32.totalorder %s15, 6
    %s25 = sphi 0, %s27
    %s28 = sphi 0, %s25
    %s29 = sphi 0, %s28
    %s45 = sphi 0, %s29
    %s49 = sphi 0, %s49
    %s51 = sphi 0, %s49
    %s52 = sphi 0, %s51
    %s66 = sphi 0, %s52
    %s70 = sphi 0, %s70
    %s72 = sphi 0, %s70
    %s73 = sphi 0, %s72
    %s87 = sphi 0, %s73
    %s91 = sphi 0, %s91
    %s93 = sphi 0, %s91
    %s94 = sphi 0, %s93
    %s108 = sphi 0, %s94
    %s112 = sphi 0, %s112
    %s114 = sphi 0, %s112
    %s115 = sphi 0, %s114
    %s129 = sphi 0, %s115
    %s133 = sphi 0, %s133
    %s135 = sphi 0, %s133
    %s136 = sphi 0, %s135
    %s150 = sphi 0, %s136
    %s154 = sphi 0, %s154
    %s156 = sphi 0, %s154
    %s157 = sphi 0, %s156
    %s171 = sphi 0, %s157
    %s175 = sphi 0, %s175
    %s177 = sphi 0, %s175
    %s178 = sphi 0, %s177
    %s192 = sphi 0, %s178
    %s196 = sphi 0, %s196
    %s198 = sphi 0, %s196
    %s199 = sphi 0, %s198
    %s213 = sphi 0, %s199
    %s219 = sphi 0, %s221
    %s222 = sphi 0, %s219
    %s223 = sphi 0, %s222
    %s239 = sphi 0, %s223
  $region4: #{dqn_forward.1} parent=0 // loop_header_branch
    %18 = sbr.rel (%p16) target = $region8
  $region5: #{dqn_forward.1} parent=0 // loop_body
    %s20 = ssub.s32 %s15, 1
    %s21 = ssub.s32 %s15, 2
    %s22 = sadd.s32 %s15, 1
    %s23 = ssub.s32 %s15, %s22
    %p24 = scmp.eq.s32.totalorder %s23, 0
    %s26 = sadd.s32 %s25, 1
    %s27 = scalar_select %p24, %s25, %s26
    %p30 = pneg %p24
    %p31 = scmp.eq.s32.totalorder %s15, 3
    %p32 = por %p30, %p31
    %p33 = scmp.ne.s32.totalorder %s25, %s28
    %p34 = scmp.eq.s32.totalorder %s15, 0
    %p35 = por %p33, %p34
    %p36 = scmp.ne.s32.totalorder %s25, %s28
    %p37 = scmp.eq.s32.totalorder %s20, 3
    %p38 = por %p36, %p37
    %p39 = scmp.ne.s32.totalorder %s28, %s29
    %p40 = scmp.eq.s32.totalorder %s20, 0
    %p41 = por %p39, %p40
    %p42 = scmp.ne.s32.totalorder %s28, %s29
    %p43 = scmp.eq.s32.totalorder %s21, 3
    %p44 = por %p42, %p43
    %p46 = scmp.ne.s32.totalorder %s29, %s45
    %p47 = scmp.eq.s32.totalorder %s21, 0
    %p48 = por %p46, %p47
    %s50 = sadd.s32 %s49, 1
    %p53 = scmp.eq.s32.totalorder %s15, 3
    %p54 = scmp.ne.s32.totalorder %s49, %s51
    %p55 = scmp.eq.s32.totalorder %s15, 0
    %p56 = por %p54, %p55
    %p57 = scmp.ne.s32.totalorder %s49, %s51
    %p58 = scmp.eq.s32.totalorder %s20, 3
    %p59 = por %p57, %p58
    %p60 = scmp.ne.s32.totalorder %s51, %s52
    %p61 = scmp.eq.s32.totalorder %s20, 0
    %p62 = por %p60, %p61
    %p63 = scmp.ne.s32.totalorder %s51, %s52
    %p64 = scmp.eq.s32.totalorder %s21, 3
    %p65 = por %p63, %p64
    %p67 = scmp.ne.s32.totalorder %s52, %s66
    %p68 = scmp.eq.s32.totalorder %s21, 0
    %p69 = por %p67, %p68
    %s71 = sadd.s32 %s70, 1
    %p74 = scmp.eq.s32.totalorder %s15, 3
    %p75 = scmp.ne.s32.totalorder %s70, %s72
    %p76 = scmp.eq.s32.totalorder %s15, 0
    %p77 = por %p75, %p76
    %p78 = scmp.ne.s32.totalorder %s70, %s72
    %p79 = scmp.eq.s32.totalorder %s20, 3
    %p80 = por %p78, %p79
    %p81 = scmp.ne.s32.totalorder %s72, %s73
    %p82 = scmp.eq.s32.totalorder %s20, 0
    %p83 = por %p81, %p82
    %p84 = scmp.ne.s32.totalorder %s72, %s73
    %p85 = scmp.eq.s32.totalorder %s21, 3
    %p86 = por %p84, %p85
    %p88 = scmp.ne.s32.totalorder %s73, %s87
    %p89 = scmp.eq.s32.totalorder %s21, 0
    %p90 = por %p88, %p89
    %s92 = sadd.s32 %s91, 1
    %p95 = scmp.eq.s32.totalorder %s15, 3
    %p96 = scmp.ne.s32.totalorder %s91, %s93
    %p97 = scmp.eq.s32.totalorder %s15, 0
    %p98 = por %p96, %p97
    %p99 = scmp.ne.s32.totalorder %s91, %s93
    %p100 = scmp.eq.s32.totalorder %s20, 3
    %p101 = por %p99, %p100
    %p102 = scmp.ne.s32.totalorder %s93, %s94
    %p103 = scmp.eq.s32.totalorder %s20, 0
    %p104 = por %p102, %p103
    %p105 = scmp.ne.s32.totalorder %s93, %s94
    %p106 = scmp.eq.s32.totalorder %s21, 3
    %p107 = por %p105, %p106
    %p109 = scmp.ne.s32.totalorder %s94, %s108
    %p110 = scmp.eq.s32.totalorder %s21, 0
    %p111 = por %p109, %p110
    %s113 = sadd.s32 %s112, 1
    %p116 = scmp.eq.s32.totalorder %s15, 3
    %p117 = scmp.ne.s32.totalorder %s112, %s114
    %p118 = scmp.eq.s32.totalorder %s15, 0
    %p119 = por %p117, %p118
    %p120 = scmp.ne.s32.totalorder %s112, %s114
    %p121 = scmp.eq.s32.totalorder %s20, 3
    %p122 = por %p120, %p121
    %p123 = scmp.ne.s32.totalorder %s114, %s115
    %p124 = scmp.eq.s32.totalorder %s20, 0
    %p125 = por %p123, %p124
    %p126 = scmp.ne.s32.totalorder %s114, %s115
    %p127 = scmp.eq.s32.totalorder %s21, 3
    %p128 = por %p126, %p127
    %p130 = scmp.ne.s32.totalorder %s115, %s129
    %p131 = scmp.eq.s32.totalorder %s21, 0
    %p132 = por %p130, %p131
    %s134 = sadd.s32 %s133, 1
    %p137 = scmp.eq.s32.totalorder %s15, 3
    %p138 = scmp.ne.s32.totalorder %s133, %s135
    %p139 = scmp.eq.s32.totalorder %s15, 0
    %p140 = por %p138, %p139
    %p141 = scmp.ne.s32.totalorder %s133, %s135
    %p142 = scmp.eq.s32.totalorder %s20, 3
    %p143 = por %p141, %p142
    %p144 = scmp.ne.s32.totalorder %s135, %s136
    %p145 = scmp.eq.s32.totalorder %s20, 0
    %p146 = por %p144, %p145
    %p147 = scmp.ne.s32.totalorder %s135, %s136
    %p148 = scmp.eq.s32.totalorder %s21, 3
    %p149 = por %p147, %p148
    %p151 = scmp.ne.s32.totalorder %s136, %s150
    %p152 = scmp.eq.s32.totalorder %s21, 0
    %p153 = por %p151, %p152
    %s155 = sadd.s32 %s154, 1
    %p158 = scmp.eq.s32.totalorder %s15, 3
    %p159 = scmp.ne.s32.totalorder %s154, %s156
    %p160 = scmp.eq.s32.totalorder %s15, 0
    %p161 = por %p159, %p160
    %p162 = scmp.ne.s32.totalorder %s154, %s156
    %p163 = scmp.eq.s32.totalorder %s20, 3
    %p164 = por %p162, %p163
    %p165 = scmp.ne.s32.totalorder %s156, %s157
    %p166 = scmp.eq.s32.totalorder %s20, 0
    %p167 = por %p165, %p166
    %p168 = scmp.ne.s32.totalorder %s156, %s157
    %p169 = scmp.eq.s32.totalorder %s21, 3
    %p170 = por %p168, %p169
    %p172 = scmp.ne.s32.totalorder %s157, %s171
    %p173 = scmp.eq.s32.totalorder %s21, 0
    %p174 = por %p172, %p173
    %s176 = sadd.s32 %s175, 1
    %p179 = scmp.eq.s32.totalorder %s15, 3
    %p180 = scmp.ne.s32.totalorder %s175, %s177
    %p181 = scmp.eq.s32.totalorder %s15, 0
    %p182 = por %p180, %p181
    %p183 = scmp.ne.s32.totalorder %s175, %s177
    %p184 = scmp.eq.s32.totalorder %s20, 3
    %p185 = por %p183, %p184
    %p186 = scmp.ne.s32.totalorder %s177, %s178
    %p187 = scmp.eq.s32.totalorder %s20, 0
    %p188 = por %p186, %p187
    %p189 = scmp.ne.s32.totalorder %s177, %s178
    %p190 = scmp.eq.s32.totalorder %s21, 3
    %p191 = por %p189, %p190
    %p193 = scmp.ne.s32.totalorder %s178, %s192
    %p194 = scmp.eq.s32.totalorder %s21, 0
    %p195 = por %p193, %p194
    %s197 = sadd.s32 %s196, 1
    %p200 = scmp.eq.s32.totalorder %s15, 3
    %p201 = scmp.ne.s32.totalorder %s196, %s198
    %p202 = scmp.eq.s32.totalorder %s15, 0
    %p203 = por %p201, %p202
    %p204 = scmp.ne.s32.totalorder %s196, %s198
    %p205 = scmp.eq.s32.totalorder %s20, 3
    %p206 = por %p204, %p205
    %p207 = scmp.ne.s32.totalorder %s198, %s199
    %p208 = scmp.eq.s32.totalorder %s20, 0
    %p209 = por %p207, %p208
    %p210 = scmp.ne.s32.totalorder %s198, %s199
    %p211 = scmp.eq.s32.totalorder %s21, 3
    %p212 = por %p210, %p211
    %p214 = scmp.ne.s32.totalorder %s199, %s213
    %p215 = scmp.eq.s32.totalorder %s21, 0
    %p216 = por %p214, %p215
    %s217 = ssub.s32 %s15, %s22
    %p218 = scmp.eq.s32.totalorder %s217, 0
    %s220 = sadd.s32 %s219, 1
    %s221 = scalar_select %p218, %s219, %s220
    %p224 = pneg %p218
    %p225 = scmp.eq.s32.totalorder %s15, 3
    %p226 = por %p224, %p225
    %p227 = scmp.ne.s32.totalorder %s219, %s222
    %p228 = scmp.eq.s32.totalorder %s15, 0
    %p229 = por %p227, %p228
    %p230 = scmp.ne.s32.totalorder %s219, %s222
    %p231 = scmp.eq.s32.totalorder %s20, 3
    %p232 = por %p230, %p231
    %p233 = scmp.ne.s32.totalorder %s222, %s223
    %p234 = scmp.eq.s32.totalorder %s20, 0
    %p235 = por %p233, %p234
    %p236 = scmp.ne.s32.totalorder %s222, %s223
    %p237 = scmp.eq.s32.totalorder %s21, 3
    %p238 = por %p236, %p237
    %p240 = scmp.ne.s32.totalorder %s223, %s239
    %p241 = scmp.eq.s32.totalorder %s21, 0
    %p242 = por %p240, %p241
    %p243 = scmp.le.s32.totalorder 1, %s15
    %p244 = scmp.lt.s32.totalorder %s15, 5
    %p245 = pnand %p243, %p244
    %p246 = pneg %p245
    // Predicated region
    $region9: #{dqn_forward.1} parent=5 // pred_check
      _
    $region10: #{dqn_forward.1} parent=5 // pred_check_branch
      %248 = sbr.rel (%p245) target = $region12
    $region11: #{dqn_forward.1} parent=5 // pred_region
      %s249 = ssub.s32 %s15, 1
      // Predicated region
      $region13: #{dqn_forward.1} parent=11 // pred_check
        %p250 = pneg %p62
      $region14: #{dqn_forward.1} parent=11 // pred_check_branch
        %252 = sbr.rel (%p250) target = $region16
      $region15: #{dqn_forward.1} parent=11 // pred_region
        _
      $region16: #{dqn_forward.1} parent=11 // pred_fallthru
        _
      // Predicated region
      $region17: #{dqn_forward.1} parent=11 // pred_check
        %p253 = pneg %p83
      $region18: #{dqn_forward.1} parent=11 // pred_check_branch
        %255 = sbr.rel (%p253) target = $region20
      $region19: #{dqn_forward.1} parent=11 // pred_region
        _
      $region20: #{dqn_forward.1} parent=11 // pred_fallthru
        _
      // Predicated region
      $region21: #{dqn_forward.1} parent=11 // pred_check
        %p256 = pneg %p104
      $region22: #{dqn_forward.1} parent=11 // pred_check_branch
        %258 = sbr.rel (%p256) target = $region24
      $region23: #{dqn_forward.1} parent=11 // pred_region
        _
      $region24: #{dqn_forward.1} parent=11 // pred_fallthru
        _
      // Predicated region
      $region25: #{dqn_forward.1} parent=11 // pred_check
        %p259 = pneg %p125
      $region26: #{dqn_forward.1} parent=11 // pred_check_branch
        %261 = sbr.rel (%p259) target = $region28
      $region27: #{dqn_forward.1} parent=11 // pred_region
        _
      $region28: #{dqn_forward.1} parent=11 // pred_fallthru
        _
      // Predicated region
      $region29: #{dqn_forward.1} parent=11 // pred_check
        %p262 = pneg %p146
      $region30: #{dqn_forward.1} parent=11 // pred_check_branch
        %264 = sbr.rel (%p262) target = $region32
      $region31: #{dqn_forward.1} parent=11 // pred_region
        _
      $region32: #{dqn_forward.1} parent=11 // pred_fallthru
        _
      // Predicated region
      $region33: #{dqn_forward.1} parent=11 // pred_check
        %p265 = pneg %p167
      $region34: #{dqn_forward.1} parent=11 // pred_check_branch
        %267 = sbr.rel (%p265) target = $region36
      $region35: #{dqn_forward.1} parent=11 // pred_region
        _
      $region36: #{dqn_forward.1} parent=11 // pred_fallthru
        _
      // Predicated region
      $region37: #{dqn_forward.1} parent=11 // pred_check
        %p268 = pneg %p188
      $region38: #{dqn_forward.1} parent=11 // pred_check_branch
        %270 = sbr.rel (%p268) target = $region40
      $region39: #{dqn_forward.1} parent=11 // pred_region
        _
      $region40: #{dqn_forward.1} parent=11 // pred_fallthru
        _
      // Predicated region
      $region41: #{dqn_forward.1} parent=11 // pred_check
        %p271 = pneg %p209
      $region42: #{dqn_forward.1} parent=11 // pred_check_branch
        %273 = sbr.rel (%p271) target = $region44
      $region43: #{dqn_forward.1} parent=11 // pred_region
        _
      $region44: #{dqn_forward.1} parent=11 // pred_fallthru
        _
    $region12: #{dqn_forward.1} parent=5 // pred_fallthru
      _
    %p274 = scmp.lt.s32.totalorder %s15, 4
    // Predicated region
    $region45: #{dqn_forward.1} parent=5 // pred_check
      %p275 = pneg %p274
    $region46: #{dqn_forward.1} parent=5 // pred_check_branch
      %277 = sbr.rel (%p275) target = $region48
    $region47: #{dqn_forward.1} parent=5 // pred_region
      // Predicated region
      $region49: #{dqn_forward.1} parent=47 // pred_check
        %p278 = pneg %p35
      $region50: #{dqn_forward.1} parent=47 // pred_check_branch
        %280 = sbr.rel (%p278) target = $region52
      $region51: #{dqn_forward.1} parent=47 // pred_region
        %s281 = smul.u32 32, %s15
        %p282 = scmp.lt.s32.totalorder %s281, 127
        %s283 = scalar_select %p282, %s281, 127
        %s284 = smul.addr %s283, 8
        %s285 = scalar_lea.vmem %s0, %s284
        %s286 = smul.u32 32, %s15
      $region52: #{dqn_forward.1} parent=47 // pred_fallthru
        _
    $region48: #{dqn_forward.1} parent=5 // pred_fallthru
      _
    %p287 = scmp.le.s32.totalorder 1, %s15
    %p288 = scmp.lt.s32.totalorder %s15, 5
    %p289 = pnand %p287, %p288
    %p290 = pneg %p289
    // Predicated region
    $region53: #{dqn_forward.1} parent=5 // pred_check
      _
    $region54: #{dqn_forward.1} parent=5 // pred_check_branch
      %292 = sbr.rel (%p289) target = $region56
    $region55: #{dqn_forward.1} parent=5 // pred_region
      %s293 = ssub.s32 %s15, 1
      %s294 = smul.u32 32, %s20
      %p295 = scmp.lt.s32.totalorder %s294, 127
      %s296 = scalar_select %p295, %s294, 127
      %s297 = smul.addr %s296, 8
      %s298 = scalar_lea.vmem %s0, %s297
      %p299 = pneg %p41
      %p300 = pneg %p38
      %p301 = pneg %p62
      %p302 = pneg %p59
      %p303 = pneg %p83
      %p304 = pneg %p80
      %p305 = pneg %p104
      %p306 = pneg %p101
      %p307 = pneg %p125
      %p308 = pneg %p122
      %p309 = pneg %p146
      %p310 = pneg %p143
      %p311 = pneg %p167
      %p312 = pneg %p164
      %p313 = pneg %p188
      %p314 = pneg %p185
      %p315 = pneg %p209
      %p316 = pneg %p206
      %p317 = pneg %p235
      %p318 = pneg %p232
      %s319 = smul.u32 32, %s20
      %p320 = scmp.lt.s32.totalorder %s319, 127
      %s321 = scalar_select %p320, %s319, 127
      %s322 = smul.addr %s321, 8
      %s323 = scalar_lea.vmem %s9, %s322
      %s324 = smul.u32 32, %s20
      %p325 = scmp.lt.s32.totalorder %s324, 127
      %s326 = scalar_select %p325, %s324, 127
      %s327 = smul.addr %s326, 8
      %s328 = scalar_lea.vmem %s0, %s327
      %s329 = smul.u32 32, %s20
      %s330 = smul.u32 32, %s20
      %p331 = scmp.lt.s32.totalorder %s330, 127
      %s332 = scalar_select %p331, %s330, 127
      %s333 = smul.addr %s332, 8
      %s334 = scalar_lea.vmem %s9, %s333
      %s335 = smul.u32 32, %s20
      %v336 = vld [vmem:[%s328] sm:$0xff]
      %v337 = vld [vmem:[%s328 + $0x8] sm:$0xff]
      %v338 = vld [vmem:[%s328 + $0x10] sm:$0xff]
      %v339 = vld [vmem:[%s328 + $0x18] sm:$0xff]
      %v340 = vld [vmem:[%s328 + $0x20] sm:$0xff]
      %v341 = vld [vmem:[%s328 + $0x28] sm:$0xff]
      %v342 = vld [vmem:[%s328 + $0x30] sm:$0xff]
      %v343 = vld [vmem:[%s328 + $0x38] sm:$0xff]
      %v344 = vld [vmem:[%s328 + $0x40] sm:$0xff]
      %v345 = vld [vmem:[%s328 + $0x48] sm:$0xff]
      %v346 = vld [vmem:[%s328 + $0x50] sm:$0xff]
      %v347 = vld [vmem:[%s328 + $0x58] sm:$0xff]
      %v348 = vld [vmem:[%s328 + $0x60] sm:$0xff]
      %v349 = vld [vmem:[%s328 + $0x68] sm:$0xff]
      %v350 = vld [vmem:[%s328 + $0x70] sm:$0xff]
      %v351 = vld [vmem:[%s328 + $0x78] sm:$0xff]
      %v352 = vld [vmem:[%s328 + $0x80] sm:$0xff]
      %v353 = vld [vmem:[%s328 + $0x88] sm:$0xff]
      %v354 = vld [vmem:[%s328 + $0x90] sm:$0xff]
      %v355 = vld [vmem:[%s328 + $0x98] sm:$0xff]
      %v356 = vld [vmem:[%s328 + $0xa0] sm:$0xff]
      %v357 = vld [vmem:[%s328 + $0xa8] sm:$0xff]
      %v358 = vld [vmem:[%s328 + $0xb0] sm:$0xff]
      %v359 = vld [vmem:[%s328 + $0xb8] sm:$0xff]
      %v360 = vld [vmem:[%s328 + $0xc0] sm:$0xff]
      %v361 = vld [vmem:[%s328 + $0xc8] sm:$0xff]
      %v362 = vld [vmem:[%s328 + $0xd0] sm:$0xff]
      %v363 = vld [vmem:[%s328 + $0xd8] sm:$0xff]
      %v364 = vld [vmem:[%s328 + $0xe0] sm:$0xff]
      %v365 = vld [vmem:[%s328 + $0xe8] sm:$0xff]
      %v366 = vld [vmem:[%s328 + $0xf0] sm:$0xff]
      %v367 = vld [vmem:[%s328 + $0xf8] sm:$0xff]
      %v368 = vld [vmem:[%s1] sm:$0xff]
      %v369 = vld [vmem:[%s1 + $0x8] sm:$0xff]
      %v370 = vld [vmem:[%s1 + $0x10] sm:$0x3]
      %v371 = vld [vmem:[%s2] sm:$0x1]
      %v373 = vlaneseq
      %v374 = vshrl.u32 %v373, 7
      %v375 = vsub.s32 0, %v374
      %v376 = vrot.slane %v371, %v375
      %vm378 = vcmask 146432
      %v380 = vsel %vm378, %v336, 0
      %v383 = vsel %vm378, %v337, 0
      %v386 = vsel %vm378, %v338, 0
      %v389 = vsel %vm378, %v339, 0
      %v392 = vsel %vm378, %v340, 0
      %v395 = vsel %vm378, %v341, 0
      %v398 = vsel %vm378, %v342, 0
      %v401 = vsel %vm378, %v343, 0
      %v404 = vsel %vm378, %v344, 0
      %v407 = vsel %vm378, %v345, 0
      %v410 = vsel %vm378, %v346, 0
      %v413 = vsel %vm378, %v347, 0
      %v416 = vsel %vm378, %v348, 0
      %v419 = vsel %vm378, %v349, 0
      %v422 = vsel %vm378, %v350, 0
      %v425 = vsel %vm378, %v351, 0
      %v428 = vsel %vm378, %v352, 0
      %v431 = vsel %vm378, %v353, 0
      %v434 = vsel %vm378, %v354, 0
      %v437 = vsel %vm378, %v355, 0
      %v440 = vsel %vm378, %v356, 0
      %v443 = vsel %vm378, %v357, 0
      %v446 = vsel %vm378, %v358, 0
      %v449 = vsel %vm378, %v359, 0
      %v452 = vsel %vm378, %v360, 0
      %v455 = vsel %vm378, %v361, 0
      %v458 = vsel %vm378, %v362, 0
      %v461 = vsel %vm378, %v363, 0
      %v464 = vsel %vm378, %v364, 0
      %v467 = vsel %vm378, %v365, 0
      %v470 = vsel %vm378, %v366, 0
      %v473 = vsel %vm378, %v367, 0
      %vm475 = vcmask 1041408
      %v477 = vsel %vm475, %v370, 0
      %479 = vmatprep.subr.mxu0 0.0
      %480 = vmatpush1.msra.mxu0 %v368
      %481 = vmatprep.subr.mxu0 0.0
      %482 = vmatpush1.msra.mxu0 %v369
      %483 = vmatprep.subr.mxu0 0.0
      %484 = vmatpush1.msra.mxu0 %v477
      %485 = vmatprep.subr.mxu0 0.0
      %486 = vmatpush1.msra.mxu0 0.0
      %487 = vmatprep.subr.mxu0 0.0
      %488 = vmatpush1.msra.mxu0 0.0
      %489 = vmatprep.subr.mxu0 0.0
      %490 = vmatpush1.msra.mxu0 0.0
      %491 = vmatprep.subr.mxu0 0.0
      %492 = vmatpush1.msra.mxu0 0.0
      %493 = vmatprep.subr.mxu0 0.0
      %494 = vmatpush1.msra.mxu0 0.0
      %495 = vmatprep.subr.mxu0 0.0
      %496 = vmatpush1.msra.mxu0 0.0
      %497 = vmatprep.subr.mxu0 0.0
      %498 = vmatpush1.msra.mxu0 0.0
      %499 = vmatprep.subr.mxu0 0.0
      %500 = vmatpush1.msra.mxu0 0.0
      %501 = vmatprep.subr.mxu0 0.0
      %502 = vmatpush1.msra.mxu0 0.0
      %503 = vmatprep.subr.mxu0 0.0
      %504 = vmatpush1.msra.mxu0 0.0
      %505 = vmatprep.subr.mxu0 0.0
      %506 = vmatpush1.msra.mxu0 0.0
      %507 = vmatprep.subr.mxu0 0.0
      %508 = vmatpush1.msra.mxu0 0.0
      %509 = vmatprep.subr.mxu0 0.0
      %510 = vmatpush1.msra.mxu0 0.0
      %511 = vmatprep.subr.mxu0 0.0
      %512 = vmatpush1.msra.mxu0 0.0
      %513 = vmatprep.subr.mxu0 0.0
      %514 = vmatpush1.msra.mxu0 0.0
      %515 = vmatprep.subr.mxu0 0.0
      %516 = vmatpush1.msra.mxu0 0.0
      %517 = vmatprep.subr.mxu0 0.0
      %518 = vmatpush1.msra.mxu0 0.0
      %519 = vmatprep.subr.mxu0 0.0
      %520 = vmatpush1.msra.mxu0 0.0
      %521 = vmatprep.subr.mxu0 0.0
      %522 = vmatpush1.msra.mxu0 0.0
      %523 = vmatprep.subr.mxu0 0.0
      %524 = vmatpush1.msra.mxu0 0.0
      %525 = vmatprep.subr.mxu0 0.0
      %526 = vmatpush1.msra.mxu0 0.0
      %527 = vmatprep.subr.mxu0 0.0
      %528 = vmatpush1.msra.mxu0 0.0
      %529 = vmatprep.subr.mxu0 0.0
      %530 = vmatpush1.msra.mxu0 0.0
      %531 = vmatprep.subr.mxu0 0.0
      %532 = vmatpush1.msra.mxu0 0.0
      %533 = vmatprep.subr.mxu0 0.0
      %534 = vmatpush1.msra.mxu0 0.0
      %535 = vmatprep.subr.mxu0 0.0
      %536 = vmatpush1.msra.mxu0 0.0
      %537 = vmatprep.subr.mxu0 0.0
      %538 = vmatpush1.msra.mxu0 0.0
      %539 = vmatprep.subr.mxu0 0.0
      %540 = vmatpush1.msra.mxu0 0.0
      %541 = vmatprep.subr.mxu0 0.0
      %542 = vmatpush1.msra.mxu0 0.0
      %543 = vmatprep.mubr.f32.mxu0 0.0
      %544 = vmatmul.mubr.f32.gmra.mrb[0].mxu0 %v380
      %v545 = vpop.f32.mrb[0].mxu0
      %v546 = vadd.f32 %v376, %v545
      %v547 = vpop.f32.mrb[0].mxu0
      %548 = vmatprep.mubr.f32.mxu0 0.0
      %549 = vmatmul.mubr.f32.gmra.mrb[0].mxu0 %v383
      %v550 = vpop.f32.mrb[0].mxu0
      %v551 = vadd.f32 %v376, %v550
      %v552 = vpop.f32.mrb[0].mxu0
      %553 = vmatprep.mubr.f32.mxu0 0.0
      %554 = vmatmul.mubr.f32.gmra.mrb[0].mxu0 %v386
      %v555 = vpop.f32.mrb[0].mxu0
      %v556 = vadd.f32 %v376, %v555
      %v557 = vpop.f32.mrb[0].mxu0
      %558 = vmatprep.mubr.f32.mxu0 0.0
      %559 = vmatmul.mubr.f32.gmra.mrb[0].mxu0 %v389
      %v560 = vpop.f32.mrb[0].mxu0
      %v561 = vadd.f32 %v376, %v560
      %v562 = vpop.f32.mrb[0].mxu0
      %563 = vmatprep.mubr.f32.mxu0 0.0
      %564 = vmatmul.mubr.f32.gmra.mrb[0].mxu0 %v392
      %v565 = vpop.f32.mrb[0].mxu0
      %v566 = vadd.f32 %v376, %v565
      %v567 = vpop.f32.mrb[0].mxu0
      %568 = vmatprep.mubr.f32.mxu0 0.0
      %569 = vmatmul.mubr.f32.gmra.mrb[0].mxu0 %v395
      %v570 = vpop.f32.mrb[0].mxu0
      %v571 = vadd.f32 %v376, %v570
      %v572 = vpop.f32.mrb[0].mxu0
      %573 = vmatprep.mubr.f32.mxu0 0.0
      %574 = vmatmul.mubr.f32.gmra.mrb[0].mxu0 %v398
      %v575 = vpop.f32.mrb[0].mxu0
      %v576 = vadd.f32 %v376, %v575
      %v577 = vpop.f32.mrb[0].mxu0
      %578 = vmatprep.mubr.f32.mxu0 0.0
      %579 = vmatmul.mubr.f32.gmra.mrb[0].mxu0 %v401
      %v580 = vpop.f32.mrb[0].mxu0
      %v581 = vadd.f32 %v376, %v580
      %v582 = vpop.f32.mrb[0].mxu0
      %583 = vmatprep.mubr.f32.mxu0 0.0
      %584 = vmatmul.mubr.f32.gmra.mrb[0].mxu0 %v404
      %v585 = vpop.f32.mrb[0].mxu0
      %v586 = vadd.f32 %v376, %v585
      %v587 = vpop.f32.mrb[0].mxu0
      %588 = vmatprep.mubr.f32.mxu0 0.0
      %589 = vmatmul.mubr.f32.gmra.mrb[0].mxu0 %v407
      %v590 = vpop.f32.mrb[0].mxu0
      %v591 = vadd.f32 %v376, %v590
      %v592 = vpop.f32.mrb[0].mxu0
      %593 = vmatprep.mubr.f32.mxu0 0.0
      %594 = vmatmul.mubr.f32.gmra.mrb[0].mxu0 %v410
      %v595 = vpop.f32.mrb[0].mxu0
      %v596 = vadd.f32 %v376, %v595
      %v597 = vpop.f32.mrb[0].mxu0
      %598 = vmatprep.mubr.f32.mxu0 0.0
      %599 = vmatmul.mubr.f32.gmra.mrb[0].mxu0 %v413
      %v600 = vpop.f32.mrb[0].mxu0
      %v601 = vadd.f32 %v376, %v600
      %v602 = vpop.f32.mrb[0].mxu0
      %603 = vmatprep.mubr.f32.mxu0 0.0
      %604 = vmatmul.mubr.f32.gmra.mrb[0].mxu0 %v416
      %v605 = vpop.f32.mrb[0].mxu0
      %v606 = vadd.f32 %v376, %v605
      %v607 = vpop.f32.mrb[0].mxu0
      %608 = vmatprep.mubr.f32.mxu0 0.0
      %609 = vmatmul.mubr.f32.gmra.mrb[0].mxu0 %v419
      %v610 = vpop.f32.mrb[0].mxu0
      %v611 = vadd.f32 %v376, %v610
      %v612 = vpop.f32.mrb[0].mxu0
      %613 = vmatprep.mubr.f32.mxu0 0.0
      %614 = vmatmul.mubr.f32.gmra.mrb[0].mxu0 %v422
      %v615 = vpop.f32.mrb[0].mxu0
      %v616 = vadd.f32 %v376, %v615
      %v617 = vpop.f32.mrb[0].mxu0
      %618 = vmatprep.mubr.f32.mxu0 0.0
      %619 = vmatmul.mubr.f32.gmra.mrb[0].mxu0 %v425
      %v620 = vpop.f32.mrb[0].mxu0
      %v621 = vadd.f32 %v376, %v620
      %v622 = vpop.f32.mrb[0].mxu0
      %623 = vmatprep.mubr.f32.mxu0 0.0
      %624 = vmatmul.mubr.f32.gmra.mrb[0].mxu0 %v428
      %v625 = vpop.f32.mrb[0].mxu0
      %v626 = vadd.f32 %v376, %v625
      %v627 = vpop.f32.mrb[0].mxu0
      %628 = vmatprep.mubr.f32.mxu0 0.0
      %629 = vmatmul.mubr.f32.gmra.mrb[0].mxu0 %v431
      %v630 = vpop.f32.mrb[0].mxu0
      %v631 = vadd.f32 %v376, %v630
      %v632 = vpop.f32.mrb[0].mxu0
      %633 = vmatprep.mubr.f32.mxu0 0.0
      %634 = vmatmul.mubr.f32.gmra.mrb[0].mxu0 %v434
      %v635 = vpop.f32.mrb[0].mxu0
      %v636 = vadd.f32 %v376, %v635
      %v637 = vpop.f32.mrb[0].mxu0
      %638 = vmatprep.mubr.f32.mxu0 0.0
      %639 = vmatmul.mubr.f32.gmra.mrb[0].mxu0 %v437
      %v640 = vpop.f32.mrb[0].mxu0
      %v641 = vadd.f32 %v376, %v640
      %v642 = vpop.f32.mrb[0].mxu0
      %643 = vmatprep.mubr.f32.mxu0 0.0
      %644 = vmatmul.mubr.f32.gmra.mrb[0].mxu0 %v440
      %v645 = vpop.f32.mrb[0].mxu0
      %v646 = vadd.f32 %v376, %v645
      %v647 = vpop.f32.mrb[0].mxu0
      %648 = vmatprep.mubr.f32.mxu0 0.0
      %649 = vmatmul.mubr.f32.gmra.mrb[0].mxu0 %v443
      %v650 = vpop.f32.mrb[0].mxu0
      %v651 = vadd.f32 %v376, %v650
      %v652 = vpop.f32.mrb[0].mxu0
      %653 = vmatprep.mubr.f32.mxu0 0.0
      %654 = vmatmul.mubr.f32.gmra.mrb[0].mxu0 %v446
      %v655 = vpop.f32.mrb[0].mxu0
      %v656 = vadd.f32 %v376, %v655
      %v657 = vpop.f32.mrb[0].mxu0
      %658 = vmatprep.mubr.f32.mxu0 0.0
      %659 = vmatmul.mubr.f32.gmra.mrb[0].mxu0 %v449
      %v660 = vpop.f32.mrb[0].mxu0
      %v661 = vadd.f32 %v376, %v660
      %v662 = vpop.f32.mrb[0].mxu0
      %663 = vmatprep.mubr.f32.mxu0 0.0
      %664 = vmatmul.mubr.f32.gmra.mrb[0].mxu0 %v452
      %v665 = vpop.f32.mrb[0].mxu0
      %v666 = vadd.f32 %v376, %v665
      %v667 = vpop.f32.mrb[0].mxu0
      %668 = vmatprep.mubr.f32.mxu0 0.0
      %669 = vmatmul.mubr.f32.gmra.mrb[0].mxu0 %v455
      %v670 = vpop.f32.mrb[0].mxu0
      %v671 = vadd.f32 %v376, %v670
      %v672 = vpop.f32.mrb[0].mxu0
      %673 = vmatprep.mubr.f32.mxu0 0.0
      %674 = vmatmul.mubr.f32.gmra.mrb[0].mxu0 %v458
      %v675 = vpop.f32.mrb[0].mxu0
      %v676 = vadd.f32 %v376, %v675
      %v677 = vpop.f32.mrb[0].mxu0
      %678 = vmatprep.mubr.f32.mxu0 0.0
      %679 = vmatmul.mubr.f32.gmra.mrb[0].mxu0 %v461
      %v680 = vpop.f32.mrb[0].mxu0
      %v681 = vadd.f32 %v376, %v680
      %v682 = vpop.f32.mrb[0].mxu0
      %683 = vmatprep.mubr.f32.mxu0 0.0
      %684 = vmatmul.mubr.f32.gmra.mrb[0].mxu0 %v464
      %v685 = vpop.f32.mrb[0].mxu0
      %v686 = vadd.f32 %v376, %v685
      %v687 = vpop.f32.mrb[0].mxu0
      %688 = vmatprep.mubr.f32.mxu0 0.0
      %689 = vmatmul.mubr.f32.gmra.mrb[0].mxu0 %v467
      %v690 = vpop.f32.mrb[0].mxu0
      %v691 = vadd.f32 %v376, %v690
      %v692 = vpop.f32.mrb[0].mxu0
      %693 = vmatprep.mubr.f32.mxu0 0.0
      %694 = vmatmul.mubr.f32.gmra.mrb[0].mxu0 %v470
      %v695 = vpop.f32.mrb[0].mxu0
      %v696 = vadd.f32 %v376, %v695
      %v697 = vpop.f32.mrb[0].mxu0
      %698 = vmatprep.mubr.f32.mxu0 0.0
      %699 = vmatmul.mubr.f32.gmra.mrb[0].mxu0 %v473
      %v700 = vpop.f32.mrb[0].mxu0
      %v701 = vadd.f32 %v376, %v700
      %v702 = vpop.f32.mrb[0].mxu0
      %703 = vdwg.mxu0
      %v704 = vmax.f32 %v546, 0.0
      %v705 = vmax.f32 %v551, 0.0
      %v706 = vmax.f32 %v556, 0.0
      %v707 = vmax.f32 %v561, 0.0
      %v708 = vmax.f32 %v566, 0.0
      %v709 = vmax.f32 %v571, 0.0
      %v710 = vmax.f32 %v576, 0.0
      %v711 = vmax.f32 %v581, 0.0
      %v712 = vmax.f32 %v586, 0.0
      %v713 = vmax.f32 %v591, 0.0
      %v714 = vmax.f32 %v596, 0.0
      %v715 = vmax.f32 %v601, 0.0
      %v716 = vmax.f32 %v606, 0.0
      %v717 = vmax.f32 %v611, 0.0
      %v718 = vmax.f32 %v616, 0.0
      %v719 = vmax.f32 %v621, 0.0
      %v720 = vmax.f32 %v626, 0.0
      %v721 = vmax.f32 %v631, 0.0
      %v722 = vmax.f32 %v636, 0.0
      %v723 = vmax.f32 %v641, 0.0
      %v724 = vmax.f32 %v646, 0.0
      %v725 = vmax.f32 %v651, 0.0
      %v726 = vmax.f32 %v656, 0.0
      %v727 = vmax.f32 %v661, 0.0
      %v728 = vmax.f32 %v666, 0.0
      %v729 = vmax.f32 %v671, 0.0
      %v730 = vmax.f32 %v676, 0.0
      %v731 = vmax.f32 %v681, 0.0
      %v732 = vmax.f32 %v686, 0.0
      %v733 = vmax.f32 %v691, 0.0
      %v734 = vmax.f32 %v696, 0.0
      %v735 = vmax.f32 %v701, 0.0
      %v736 = vld [vmem:[%s3] sm:$0xff]
      %v737 = vld [vmem:[%s3 + $0x8] sm:$0xff]
      %v738 = vld [vmem:[%s3 + $0x10] sm:$0xff]
      %v739 = vld [vmem:[%s3 + $0x18] sm:$0xff]
      %v740 = vld [vmem:[%s4] sm:$0x1]
      %v742 = vlaneseq
      %v743 = vshrl.u32 %v742, 7
      %v744 = vsub.s32 0, %v743
      %v745 = vrot.slane %v740, %v744
      %vm747 = vcmask 261120
      %v749 = vsel %vm747, %v704, 0
      %v752 = vsel %vm747, %v705, 0
      %v755 = vsel %vm747, %v706, 0
      %v758 = vsel %vm747, %v707, 0
      %v761 = vsel %vm747, %v708, 0
      %v764 = vsel %vm747, %v709, 0
      %v767 = vsel %vm747, %v710, 0
      %v770 = vsel %vm747, %v711, 0
      %v773 = vsel %vm747, %v712, 0
      %v776 = vsel %vm747, %v713, 0
      %v779 = vsel %vm747, %v714, 0
      %v782 = vsel %vm747, %v715, 0
      %v785 = vsel %vm747, %v716, 0
      %v788 = vsel %vm747, %v717, 0
      %v791 = vsel %vm747, %v718, 0
      %v794 = vsel %vm747, %v719, 0
      %v797 = vsel %vm747, %v720, 0
      %v800 = vsel %vm747, %v721, 0
      %v803 = vsel %vm747, %v722, 0
      %v806 = vsel %vm747, %v723, 0
      %v809 = vsel %vm747, %v724, 0
      %v812 = vsel %vm747, %v725, 0
      %v815 = vsel %vm747, %v726, 0
      %v818 = vsel %vm747, %v727, 0
      %v821 = vsel %vm747, %v728, 0
      %v824 = vsel %vm747, %v729, 0
      %v827 = vsel %vm747, %v730, 0
      %v830 = vsel %vm747, %v731, 0
      %v833 = vsel %vm747, %v732, 0
      %v836 = vsel %vm747, %v733, 0
      %v839 = vsel %vm747, %v734, 0
      %v842 = vsel %vm747, %v735, 0
      %844 = vmatprep.subr.mxu0 0.0
      %845 = vmatpush1.msra.mxu0 %v736
      %846 = vmatprep.subr.mxu0 0.0
      %847 = vmatpush1.msra.mxu0 %v737
      %848 = vmatprep.subr.mxu0 0.0
      %849 = vmatpush1.msra.mxu0 %v738
      %850 = vmatprep.subr.mxu0 0.0
      %851 = vmatpush1.msra.mxu0 %v739
      %852 = vmatprep.subr.mxu0 0.0
      %853 = vmatpush1.msra.mxu0 0.0
      %854 = vmatprep.subr.mxu0 0.0
      %855 = vmatpush1.msra.mxu0 0.0
      %856 = vmatprep.subr.mxu0 0.0
      %857 = vmatpush1.msra.mxu0 0.0
      %858 = vmatprep.subr.mxu0 0.0
      %859 = vmatpush1.msra.mxu0 0.0
      %860 = vmatprep.subr.mxu0 0.0
      %861 = vmatpush1.msra.mxu0 0.0
      %862 = vmatprep.subr.mxu0 0.0
      %863 = vmatpush1.msra.mxu0 0.0
      %864 = vmatprep.subr.mxu0 0.0
      %865 = vmatpush1.msra.mxu0 0.0
      %866 = vmatprep.subr.mxu0 0.0
      %867 = vmatpush1.msra.mxu0 0.0
      %868 = vmatprep.subr.mxu0 0.0
      %869 = vmatpush1.msra.mxu0 0.0
      %870 = vmatprep.subr.mxu0 0.0
      %871 = vmatpush1.msra.mxu0 0.0
      %872 = vmatprep.subr.mxu0 0.0
      %873 = vmatpush1.msra.mxu0 0.0
      %874 = vmatprep.subr.mxu0 0.0
      %875 = vmatpush1.msra.mxu0 0.0
      %876 = vmatprep.subr.mxu0 0.0
      %877 = vmatpush1.msra.mxu0 0.0
      %878 = vmatprep.subr.mxu0 0.0
      %879 = vmatpush1.msra.mxu0 0.0
      %880 = vmatprep.subr.mxu0 0.0
      %881 = vmatpush1.msra.mxu0 0.0
      %882 = vmatprep.subr.mxu0 0.0
      %883 = vmatpush1.msra.mxu0 0.0
      %884 = vmatprep.subr.mxu0 0.0
      %885 = vmatpush1.msra.mxu0 0.0
      %886 = vmatprep.subr.mxu0 0.0
      %887 = vmatpush1.msra.mxu0 0.0
      %888 = vmatprep.subr.mxu0 0.0
      %889 = vmatpush1.msra.mxu0 0.0
      %890 = vmatprep.subr.mxu0 0.0
      %891 = vmatpush1.msra.mxu0 0.0
      %892 = vmatprep.subr.mxu0 0.0
      %893 = vmatpush1.msra.mxu0 0.0
      %894 = vmatprep.subr.mxu0 0.0
      %895 = vmatpush1.msra.mxu0 0.0
      %896 = vmatprep.subr.mxu0 0.0
      %897 = vmatpush1.msra.mxu0 0.0
      %898 = vmatprep.subr.mxu0 0.0
      %899 = vmatpush1.msra.mxu0 0.0
      %900 = vmatprep.subr.mxu0 0.0
      %901 = vmatpush1.msra.mxu0 0.0
      %902 = vmatprep.subr.mxu0 0.0
      %903 = vmatpush1.msra.mxu0 0.0
      %904 = vmatprep.subr.mxu0 0.0
      %905 = vmatpush1.msra.mxu0 0.0
      %906 = vmatprep.subr.mxu0 0.0
      %907 = vmatpush1.msra.mxu0 0.0
      %908 = vmatprep.mubr.f32.mxu0 0.0
      %909 = vmatmul.mubr.f32.gmra.mrb[0].mxu0 %v749
      %v910 = vpop.f32.mrb[0].mxu0
      %v911 = vadd.f32 %v745, %v910
      %v912 = vpop.f32.mrb[0].mxu0
      %913 = vmatprep.mubr.f32.mxu0 0.0
      %914 = vmatmul.mubr.f32.gmra.mrb[0].mxu0 %v752
      %v915 = vpop.f32.mrb[0].mxu0
      %v916 = vadd.f32 %v745, %v915
      %v917 = vpop.f32.mrb[0].mxu0
      %918 = vmatprep.mubr.f32.mxu0 0.0
      %919 = vmatmul.mubr.f32.gmra.mrb[0].mxu0 %v755
      %v920 = vpop.f32.mrb[0].mxu0
      %v921 = vadd.f32 %v745, %v920
      %v922 = vpop.f32.mrb[0].mxu0
      %923 = vmatprep.mubr.f32.mxu0 0.0
      %924 = vmatmul.mubr.f32.gmra.mrb[0].mxu0 %v758
      %v925 = vpop.f32.mrb[0].mxu0
      %v926 = vadd.f32 %v745, %v925
      %v927 = vpop.f32.mrb[0].mxu0
      %928 = vmatprep.mubr.f32.mxu0 0.0
      %929 = vmatmul.mubr.f32.gmra.mrb[0].mxu0 %v761
      %v930 = vpop.f32.mrb[0].mxu0
      %v931 = vadd.f32 %v745, %v930
      %v932 = vpop.f32.mrb[0].mxu0
      %933 = vmatprep.mubr.f32.mxu0 0.0
      %934 = vmatmul.mubr.f32.gmra.mrb[0].mxu0 %v764
      %v935 = vpop.f32.mrb[0].mxu0
      %v936 = vadd.f32 %v745, %v935
      %v937 = vpop.f32.mrb[0].mxu0
      %938 = vmatprep.mubr.f32.mxu0 0.0
      %939 = vmatmul.mubr.f32.gmra.mrb[0].mxu0 %v767
      %v940 = vpop.f32.mrb[0].mxu0
      %v941 = vadd.f32 %v745, %v940
      %v942 = vpop.f32.mrb[0].mxu0
      %943 = vmatprep.mubr.f32.mxu0 0.0
      %944 = vmatmul.mubr.f32.gmra.mrb[0].mxu0 %v770
      %v945 = vpop.f32.mrb[0].mxu0
      %v946 = vadd.f32 %v745, %v945
      %v947 = vpop.f32.mrb[0].mxu0
      %948 = vmatprep.mubr.f32.mxu0 0.0
      %949 = vmatmul.mubr.f32.gmra.mrb[0].mxu0 %v773
      %v950 = vpop.f32.mrb[0].mxu0
      %v951 = vadd.f32 %v745, %v950
      %v952 = vpop.f32.mrb[0].mxu0
      %953 = vmatprep.mubr.f32.mxu0 0.0
      %954 = vmatmul.mubr.f32.gmra.mrb[0].mxu0 %v776
      %v955 = vpop.f32.mrb[0].mxu0
      %v956 = vadd.f32 %v745, %v955
      %v957 = vpop.f32.mrb[0].mxu0
      %958 = vmatprep.mubr.f32.mxu0 0.0
      %959 = vmatmul.mubr.f32.gmra.mrb[0].mxu0 %v779
      %v960 = vpop.f32.mrb[0].mxu0
      %v961 = vadd.f32 %v745, %v960
      %v962 = vpop.f32.mrb[0].mxu0
      %963 = vmatprep.mubr.f32.mxu0 0.0
      %964 = vmatmul.mubr.f32.gmra.mrb[0].mxu0 %v782
      %v965 = vpop.f32.mrb[0].mxu0
      %v966 = vadd.f32 %v745, %v965
      %v967 = vpop.f32.mrb[0].mxu0
      %968 = vmatprep.mubr.f32.mxu0 0.0
      %969 = vmatmul.mubr.f32.gmra.mrb[0].mxu0 %v785
      %v970 = vpop.f32.mrb[0].mxu0
      %v971 = vadd.f32 %v745, %v970
      %v972 = vpop.f32.mrb[0].mxu0
      %973 = vmatprep.mubr.f32.mxu0 0.0
      %974 = vmatmul.mubr.f32.gmra.mrb[0].mxu0 %v788
      %v975 = vpop.f32.mrb[0].mxu0
      %v976 = vadd.f32 %v745, %v975
      %v977 = vpop.f32.mrb[0].mxu0
      %978 = vmatprep.mubr.f32.mxu0 0.0
      %979 = vmatmul.mubr.f32.gmra.mrb[0].mxu0 %v791
      %v980 = vpop.f32.mrb[0].mxu0
      %v981 = vadd.f32 %v745, %v980
      %v982 = vpop.f32.mrb[0].mxu0
      %983 = vmatprep.mubr.f32.mxu0 0.0
      %984 = vmatmul.mubr.f32.gmra.mrb[0].mxu0 %v794
      %v985 = vpop.f32.mrb[0].mxu0
      %v986 = vadd.f32 %v745, %v985
      %v987 = vpop.f32.mrb[0].mxu0
      %988 = vmatprep.mubr.f32.mxu0 0.0
      %989 = vmatmul.mubr.f32.gmra.mrb[0].mxu0 %v797
      %v990 = vpop.f32.mrb[0].mxu0
      %v991 = vadd.f32 %v745, %v990
      %v992 = vpop.f32.mrb[0].mxu0
      %993 = vmatprep.mubr.f32.mxu0 0.0
      %994 = vmatmul.mubr.f32.gmra.mrb[0].mxu0 %v800
      %v995 = vpop.f32.mrb[0].mxu0
      %v996 = vadd.f32 %v745, %v995
      %v997 = vpop.f32.mrb[0].mxu0
      %998 = vmatprep.mubr.f32.mxu0 0.0
      %999 = vmatmul.mubr.f32.gmra.mrb[0].mxu0 %v803
      %v1000 = vpop.f32.mrb[0].mxu0
      %v1001 = vadd.f32 %v745, %v1000
      %v1002 = vpop.f32.mrb[0].mxu0
      %1003 = vmatprep.mubr.f32.mxu0 0.0
      %1004 = vmatmul.mubr.f32.gmra.mrb[0].mxu0 %v806
      %v1005 = vpop.f32.mrb[0].mxu0
      %v1006 = vadd.f32 %v745, %v1005
      %v1007 = vpop.f32.mrb[0].mxu0
      %1008 = vmatprep.mubr.f32.mxu0 0.0
      %1009 = vmatmul.mubr.f32.gmra.mrb[0].mxu0 %v809
      %v1010 = vpop.f32.mrb[0].mxu0
      %v1011 = vadd.f32 %v745, %v1010
      %v1012 = vpop.f32.mrb[0].mxu0
      %1013 = vmatprep.mubr.f32.mxu0 0.0
      %1014 = vmatmul.mubr.f32.gmra.mrb[0].mxu0 %v812
      %v1015 = vpop.f32.mrb[0].mxu0
      %v1016 = vadd.f32 %v745, %v1015
      %v1017 = vpop.f32.mrb[0].mxu0
      %1018 = vmatprep.mubr.f32.mxu0 0.0
      %1019 = vmatmul.mubr.f32.gmra.mrb[0].mxu0 %v815
      %v1020 = vpop.f32.mrb[0].mxu0
      %v1021 = vadd.f32 %v745, %v1020
      %v1022 = vpop.f32.mrb[0].mxu0
      %1023 = vmatprep.mubr.f32.mxu0 0.0
      %1024 = vmatmul.mubr.f32.gmra.mrb[0].mxu0 %v818
      %v1025 = vpop.f32.mrb[0].mxu0
      %v1026 = vadd.f32 %v745, %v1025
      %v1027 = vpop.f32.mrb[0].mxu0
      %1028 = vmatprep.mubr.f32.mxu0 0.0
      %1029 = vmatmul.mubr.f32.gmra.mrb[0].mxu0 %v821
      %v1030 = vpop.f32.mrb[0].mxu0
      %v1031 = vadd.f32 %v745, %v1030
      %v1032 = vpop.f32.mrb[0].mxu0
      %1033 = vmatprep.mubr.f32.mxu0 0.0
      %1034 = vmatmul.mubr.f32.gmra.mrb[0].mxu0 %v824
      %v1035 = vpop.f32.mrb[0].mxu0
      %v1036 = vadd.f32 %v745, %v1035
      %v1037 = vpop.f32.mrb[0].mxu0
      %1038 = vmatprep.mubr.f32.mxu0 0.0
      %1039 = vmatmul.mubr.f32.gmra.mrb[0].mxu0 %v827
      %v1040 = vpop.f32.mrb[0].mxu0
      %v1041 = vadd.f32 %v745, %v1040
      %v1042 = vpop.f32.mrb[0].mxu0
      %1043 = vmatprep.mubr.f32.mxu0 0.0
      %1044 = vmatmul.mubr.f32.gmra.mrb[0].mxu0 %v830
      %v1045 = vpop.f32.mrb[0].mxu0
      %v1046 = vadd.f32 %v745, %v1045
      %v1047 = vpop.f32.mrb[0].mxu0
      %1048 = vmatprep.mubr.f32.mxu0 0.0
      %1049 = vmatmul.mubr.f32.gmra.mrb[0].mxu0 %v833
      %v1050 = vpop.f32.mrb[0].mxu0
      %v1051 = vadd.f32 %v745, %v1050
      %v1052 = vpop.f32.mrb[0].mxu0
      %1053 = vmatprep.mubr.f32.mxu0 0.0
      %1054 = vmatmul.mubr.f32.gmra.mrb[0].mxu0 %v836
      %v1055 = vpop.f32.mrb[0].mxu0
      %v1056 = vadd.f32 %v745, %v1055
      %v1057 = vpop.f32.mrb[0].mxu0
      %1058 = vmatprep.mubr.f32.mxu0 0.0
      %1059 = vmatmul.mubr.f32.gmra.mrb[0].mxu0 %v839
      %v1060 = vpop.f32.mrb[0].mxu0
      %v1061 = vadd.f32 %v745, %v1060
      %v1062 = vpop.f32.mrb[0].mxu0
      %1063 = vmatprep.mubr.f32.mxu0 0.0
      %1064 = vmatmul.mubr.f32.gmra.mrb[0].mxu0 %v842
      %v1065 = vpop.f32.mrb[0].mxu0
      %v1066 = vadd.f32 %v745, %v1065
      %v1067 = vpop.f32.mrb[0].mxu0
      %1068 = vdwg.mxu0
      %v1069 = vmax.f32 %v911, 0.0
      %v1070 = vmax.f32 %v916, 0.0
      %v1071 = vmax.f32 %v921, 0.0
      %v1072 = vmax.f32 %v926, 0.0
      %v1073 = vmax.f32 %v931, 0.0
      %v1074 = vmax.f32 %v936, 0.0
      %v1075 = vmax.f32 %v941, 0.0
      %v1076 = vmax.f32 %v946, 0.0
      %v1077 = vmax.f32 %v951, 0.0
      %v1078 = vmax.f32 %v956, 0.0
      %v1079 = vmax.f32 %v961, 0.0
      %v1080 = vmax.f32 %v966, 0.0
      %v1081 = vmax.f32 %v971, 0.0
      %v1082 = vmax.f32 %v976, 0.0
      %v1083 = vmax.f32 %v981, 0.0
      %v1084 = vmax.f32 %v986, 0.0
      %v1085 = vmax.f32 %v991, 0.0
      %v1086 = vmax.f32 %v996, 0.0
      %v1087 = vmax.f32 %v1001, 0.0
      %v1088 = vmax.f32 %v1006, 0.0
      %v1089 = vmax.f32 %v1011, 0.0
      %v1090 = vmax.f32 %v1016, 0.0
      %v1091 = vmax.f32 %v1021, 0.0
      %v1092 = vmax.f32 %v1026, 0.0
      %v1093 = vmax.f32 %v1031, 0.0
      %v1094 = vmax.f32 %v1036, 0.0
      %v1095 = vmax.f32 %v1041, 0.0
      %v1096 = vmax.f32 %v1046, 0.0
      %v1097 = vmax.f32 %v1051, 0.0
      %v1098 = vmax.f32 %v1056, 0.0
      %v1099 = vmax.f32 %v1061, 0.0
      %v1100 = vmax.f32 %v1066, 0.0
      %v1101 = vld [vmem:[%s5] sm:$0xff]
      %v1102 = vld [vmem:[%s5 + $0x8] sm:$0xff]
      %v1103 = vld [vmem:[%s5 + $0x10] sm:$0xff]
      %v1104 = vld [vmem:[%s5 + $0x18] sm:$0xff]
      %v1105 = vld [vmem:[%s5 + $0x20] sm:$0xff]
      %v1106 = vld [vmem:[%s5 + $0x28] sm:$0xff]
      %v1107 = vld [vmem:[%s5 + $0x30] sm:$0xff]
      %v1108 = vld [vmem:[%s5 + $0x38] sm:$0xff]
      %v1109 = vld [vmem:[%s6] sm:$0x1]
      %v1111 = vlaneseq
      %v1112 = vshrl.u32 %v1111, 7
      %v1113 = vsub.s32 0, %v1112
      %v1114 = vrot.slane %v1109, %v1113
      %vm1116 = vcmask 523264
      %v1118 = vsel %vm1116, %v1069, 0
      %v1121 = vsel %vm1116, %v1070, 0
      %v1124 = vsel %vm1116, %v1071, 0
      %v1127 = vsel %vm1116, %v1072, 0
      %v1130 = vsel %vm1116, %v1073, 0
      %v1133 = vsel %vm1116, %v1074, 0
      %v1136 = vsel %vm1116, %v1075, 0
      %v1139 = vsel %vm1116, %v1076, 0
      %v1142 = vsel %vm1116, %v1077, 0
      %v1145 = vsel %vm1116, %v1078, 0
      %v1148 = vsel %vm1116, %v1079, 0
      %v1151 = vsel %vm1116, %v1080, 0
      %v1154 = vsel %vm1116, %v1081, 0
      %v1157 = vsel %vm1116, %v1082, 0
      %v1160 = vsel %vm1116, %v1083, 0
      %v1163 = vsel %vm1116, %v1084, 0
      %v1166 = vsel %vm1116, %v1085, 0
      %v1169 = vsel %vm1116, %v1086, 0
      %v1172 = vsel %vm1116, %v1087, 0
      %v1175 = vsel %vm1116, %v1088, 0
      %v1178 = vsel %vm1116, %v1089, 0
      %v1181 = vsel %vm1116, %v1090, 0
      %v1184 = vsel %vm1116, %v1091, 0
      %v1187 = vsel %vm1116, %v1092, 0
      %v1190 = vsel %vm1116, %v1093, 0
      %v1193 = vsel %vm1116, %v1094, 0
      %v1196 = vsel %vm1116, %v1095, 0
      %v1199 = vsel %vm1116, %v1096, 0
      %v1202 = vsel %vm1116, %v1097, 0
      %v1205 = vsel %vm1116, %v1098, 0
      %v1208 = vsel %vm1116, %v1099, 0
      %v1211 = vsel %vm1116, %v1100, 0
      %1213 = vmatprep.subr.mxu0 0.0
      %1214 = vmatpush1.msra.mxu0 %v1101
      %1215 = vmatprep.subr.mxu0 0.0
      %1216 = vmatpush1.msra.mxu0 %v1102
      %1217 = vmatprep.subr.mxu0 0.0
      %1218 = vmatpush1.msra.mxu0 %v1103
      %1219 = vmatprep.subr.mxu0 0.0
      %1220 = vmatpush1.msra.mxu0 %v1104
      %1221 = vmatprep.subr.mxu0 0.0
      %1222 = vmatpush1.msra.mxu0 %v1105
      %1223 = vmatprep.subr.mxu0 0.0
      %1224 = vmatpush1.msra.mxu0 %v1106
      %1225 = vmatprep.subr.mxu0 0.0
      %1226 = vmatpush1.msra.mxu0 %v1107
      %1227 = vmatprep.subr.mxu0 0.0
      %1228 = vmatpush1.msra.mxu0 %v1108
      %1229 = vmatprep.subr.mxu0 0.0
      %1230 = vmatpush1.msra.mxu0 0.0
      %1231 = vmatprep.subr.mxu0 0.0
      %1232 = vmatpush1.msra.mxu0 0.0
      %1233 = vmatprep.subr.mxu0 0.0
      %1234 = vmatpush1.msra.mxu0 0.0
      %1235 = vmatprep.subr.mxu0 0.0
      %1236 = vmatpush1.msra.mxu0 0.0
      %1237 = vmatprep.subr.mxu0 0.0
      %1238 = vmatpush1.msra.mxu0 0.0
      %1239 = vmatprep.subr.mxu0 0.0
      %1240 = vmatpush1.msra.mxu0 0.0
      %1241 = vmatprep.subr.mxu0 0.0
      %1242 = vmatpush1.msra.mxu0 0.0
      %1243 = vmatprep.subr.mxu0 0.0
      %1244 = vmatpush1.msra.mxu0 0.0
      %1245 = vmatprep.subr.mxu0 0.0
      %1246 = vmatpush1.msra.mxu0 0.0
      %1247 = vmatprep.subr.mxu0 0.0
      %1248 = vmatpush1.msra.mxu0 0.0
      %1249 = vmatprep.subr.mxu0 0.0
      %1250 = vmatpush1.msra.mxu0 0.0
      %1251 = vmatprep.subr.mxu0 0.0
      %1252 = vmatpush1.msra.mxu0 0.0
      %1253 = vmatprep.subr.mxu0 0.0
      %1254 = vmatpush1.msra.mxu0 0.0
      %1255 = vmatprep.subr.mxu0 0.0
      %1256 = vmatpush1.msra.mxu0 0.0
      %1257 = vmatprep.subr.mxu0 0.0
      %1258 = vmatpush1.msra.mxu0 0.0
      %1259 = vmatprep.subr.mxu0 0.0
      %1260 = vmatpush1.msra.mxu0 0.0
      %1261 = vmatprep.subr.mxu0 0.0
      %1262 = vmatpush1.msra.mxu0 0.0
      %1263 = vmatprep.subr.mxu0 0.0
      %1264 = vmatpush1.msra.mxu0 0.0
      %1265 = vmatprep.subr.mxu0 0.0
      %1266 = vmatpush1.msra.mxu0 0.0
      %1267 = vmatprep.subr.mxu0 0.0
      %1268 = vmatpush1.msra.mxu0 0.0
      %1269 = vmatprep.subr.mxu0 0.0
      %1270 = vmatpush1.msra.mxu0 0.0
      %1271 = vmatprep.subr.mxu0 0.0
      %1272 = vmatpush1.msra.mxu0 0.0
      %1273 = vmatprep.subr.mxu0 0.0
      %1274 = vmatpush1.msra.mxu0 0.0
      %1275 = vmatprep.subr.mxu0 0.0
      %1276 = vmatpush1.msra.mxu0 0.0
      %1277 = vmatprep.mubr.f32.mxu0 0.0
      %1278 = vmatmul.mubr.f32.gmra.mrb[0].mxu0 %v1118
      %v1279 = vpop.f32.mrb[0].mxu0
      %v1280 = vadd.f32 %v1114, %v1279
      %v1281 = vpop.f32.mrb[0].mxu0
      %1282 = vmatprep.mubr.f32.mxu0 0.0
      %1283 = vmatmul.mubr.f32.gmra.mrb[0].mxu0 %v1121
      %v1284 = vpop.f32.mrb[0].mxu0
      %v1285 = vadd.f32 %v1114, %v1284
      %v1286 = vpop.f32.mrb[0].mxu0
      %1287 = vmatprep.mubr.f32.mxu0 0.0
      %1288 = vmatmul.mubr.f32.gmra.mrb[0].mxu0 %v1124
      %v1289 = vpop.f32.mrb[0].mxu0
      %v1290 = vadd.f32 %v1114, %v1289
      %v1291 = vpop.f32.mrb[0].mxu0
      %1292 = vmatprep.mubr.f32.mxu0 0.0
      %1293 = vmatmul.mubr.f32.gmra.mrb[0].mxu0 %v1127
      %v1294 = vpop.f32.mrb[0].mxu0
      %v1295 = vadd.f32 %v1114, %v1294
      %v1296 = vpop.f32.mrb[0].mxu0
      %1297 = vmatprep.mubr.f32.mxu0 0.0
      %1298 = vmatmul.mubr.f32.gmra.mrb[0].mxu0 %v1130
      %v1299 = vpop.f32.mrb[0].mxu0
      %v1300 = vadd.f32 %v1114, %v1299
      %v1301 = vpop.f32.mrb[0].mxu0
      %1302 = vmatprep.mubr.f32.mxu0 0.0
      %1303 = vmatmul.mubr.f32.gmra.mrb[0].mxu0 %v1133
      %v1304 = vpop.f32.mrb[0].mxu0
      %v1305 = vadd.f32 %v1114, %v1304
      %v1306 = vpop.f32.mrb[0].mxu0
      %1307 = vmatprep.mubr.f32.mxu0 0.0
      %1308 = vmatmul.mubr.f32.gmra.mrb[0].mxu0 %v1136
      %v1309 = vpop.f32.mrb[0].mxu0
      %v1310 = vadd.f32 %v1114, %v1309
      %v1311 = vpop.f32.mrb[0].mxu0
      %1312 = vmatprep.mubr.f32.mxu0 0.0
      %1313 = vmatmul.mubr.f32.gmra.mrb[0].mxu0 %v1139
      %v1314 = vpop.f32.mrb[0].mxu0
      %v1315 = vadd.f32 %v1114, %v1314
      %v1316 = vpop.f32.mrb[0].mxu0
      %1317 = vmatprep.mubr.f32.mxu0 0.0
      %1318 = vmatmul.mubr.f32.gmra.mrb[0].mxu0 %v1142
      %v1319 = vpop.f32.mrb[0].mxu0
      %v1320 = vadd.f32 %v1114, %v1319
      %v1321 = vpop.f32.mrb[0].mxu0
      %1322 = vmatprep.mubr.f32.mxu0 0.0
      %1323 = vmatmul.mubr.f32.gmra.mrb[0].mxu0 %v1145
      %v1324 = vpop.f32.mrb[0].mxu0
      %v1325 = vadd.f32 %v1114, %v1324
      %v1326 = vpop.f32.mrb[0].mxu0
      %1327 = vmatprep.mubr.f32.mxu0 0.0
      %1328 = vmatmul.mubr.f32.gmra.mrb[0].mxu0 %v1148
      %v1329 = vpop.f32.mrb[0].mxu0
      %v1330 = vadd.f32 %v1114, %v1329
      %v1331 = vpop.f32.mrb[0].mxu0
      %1332 = vmatprep.mubr.f32.mxu0 0.0
      %1333 = vmatmul.mubr.f32.gmra.mrb[0].mxu0 %v1151
      %v1334 = vpop.f32.mrb[0].mxu0
      %v1335 = vadd.f32 %v1114, %v1334
      %v1336 = vpop.f32.mrb[0].mxu0
      %1337 = vmatprep.mubr.f32.mxu0 0.0
      %1338 = vmatmul.mubr.f32.gmra.mrb[0].mxu0 %v1154
      %v1339 = vpop.f32.mrb[0].mxu0
      %v1340 = vadd.f32 %v1114, %v1339
      %v1341 = vpop.f32.mrb[0].mxu0
      %1342 = vmatprep.mubr.f32.mxu0 0.0
      %1343 = vmatmul.mubr.f32.gmra.mrb[0].mxu0 %v1157
      %v1344 = vpop.f32.mrb[0].mxu0
      %v1345 = vadd.f32 %v1114, %v1344
      %v1346 = vpop.f32.mrb[0].mxu0
      %1347 = vmatprep.mubr.f32.mxu0 0.0
      %1348 = vmatmul.mubr.f32.gmra.mrb[0].mxu0 %v1160
      %v1349 = vpop.f32.mrb[0].mxu0
      %v1350 = vadd.f32 %v1114, %v1349
      %v1351 = vpop.f32.mrb[0].mxu0
      %1352 = vmatprep.mubr.f32.mxu0 0.0
      %1353 = vmatmul.mubr.f32.gmra.mrb[0].mxu0 %v1163
      %v1354 = vpop.f32.mrb[0].mxu0
      %v1355 = vadd.f32 %v1114, %v1354
      %v1356 = vpop.f32.mrb[0].mxu0
      %1357 = vmatprep.mubr.f32.mxu0 0.0
      %1358 = vmatmul.mubr.f32.gmra.mrb[0].mxu0 %v1166
      %v1359 = vpop.f32.mrb[0].mxu0
      %v1360 = vadd.f32 %v1114, %v1359
      %v1361 = vpop.f32.mrb[0].mxu0
      %1362 = vmatprep.mubr.f32.mxu0 0.0
      %1363 = vmatmul.mubr.f32.gmra.mrb[0].mxu0 %v1169
      %v1364 = vpop.f32.mrb[0].mxu0
      %v1365 = vadd.f32 %v1114, %v1364
      %v1366 = vpop.f32.mrb[0].mxu0
      %1367 = vmatprep.mubr.f32.mxu0 0.0
      %1368 = vmatmul.mubr.f32.gmra.mrb[0].mxu0 %v1172
      %v1369 = vpop.f32.mrb[0].mxu0
      %v1370 = vadd.f32 %v1114, %v1369
      %v1371 = vpop.f32.mrb[0].mxu0
      %1372 = vmatprep.mubr.f32.mxu0 0.0
      %1373 = vmatmul.mubr.f32.gmra.mrb[0].mxu0 %v1175
      %v1374 = vpop.f32.mrb[0].mxu0
      %v1375 = vadd.f32 %v1114, %v1374
      %v1376 = vpop.f32.mrb[0].mxu0
      %1377 = vmatprep.mubr.f32.mxu0 0.0
      %1378 = vmatmul.mubr.f32.gmra.mrb[0].mxu0 %v1178
      %v1379 = vpop.f32.mrb[0].mxu0
      %v1380 = vadd.f32 %v1114, %v1379
      %v1381 = vpop.f32.mrb[0].mxu0
      %1382 = vmatprep.mubr.f32.mxu0 0.0
      %1383 = vmatmul.mubr.f32.gmra.mrb[0].mxu0 %v1181
      %v1384 = vpop.f32.mrb[0].mxu0
      %v1385 = vadd.f32 %v1114, %v1384
      %v1386 = vpop.f32.mrb[0].mxu0
      %1387 = vmatprep.mubr.f32.mxu0 0.0
      %1388 = vmatmul.mubr.f32.gmra.mrb[0].mxu0 %v1184
      %v1389 = vpop.f32.mrb[0].mxu0
      %v1390 = vadd.f32 %v1114, %v1389
      %v1391 = vpop.f32.mrb[0].mxu0
      %1392 = vmatprep.mubr.f32.mxu0 0.0
      %1393 = vmatmul.mubr.f32.gmra.mrb[0].mxu0 %v1187
      %v1394 = vpop.f32.mrb[0].mxu0
      %v1395 = vadd.f32 %v1114, %v1394
      %v1396 = vpop.f32.mrb[0].mxu0
      %1397 = vmatprep.mubr.f32.mxu0 0.0
      %1398 = vmatmul.mubr.f32.gmra.mrb[0].mxu0 %v1190
      %v1399 = vpop.f32.mrb[0].mxu0
      %v1400 = vadd.f32 %v1114, %v1399
      %v1401 = vpop.f32.mrb[0].mxu0
      %1402 = vmatprep.mubr.f32.mxu0 0.0
      %1403 = vmatmul.mubr.f32.gmra.mrb[0].mxu0 %v1193
      %v1404 = vpop.f32.mrb[0].mxu0
      %v1405 = vadd.f32 %v1114, %v1404
      %v1406 = vpop.f32.mrb[0].mxu0
      %1407 = vmatprep.mubr.f32.mxu0 0.0
      %1408 = vmatmul.mubr.f32.gmra.mrb[0].mxu0 %v1196
      %v1409 = vpop.f32.mrb[0].mxu0
      %v1410 = vadd.f32 %v1114, %v1409
      %v1411 = vpop.f32.mrb[0].mxu0
      %1412 = vmatprep.mubr.f32.mxu0 0.0
      %1413 = vmatmul.mubr.f32.gmra.mrb[0].mxu0 %v1199
      %v1414 = vpop.f32.mrb[0].mxu0
      %v1415 = vadd.f32 %v1114, %v1414
      %v1416 = vpop.f32.mrb[0].mxu0
      %1417 = vmatprep.mubr.f32.mxu0 0.0
      %1418 = vmatmul.mubr.f32.gmra.mrb[0].mxu0 %v1202
      %v1419 = vpop.f32.mrb[0].mxu0
      %v1420 = vadd.f32 %v1114, %v1419
      %v1421 = vpop.f32.mrb[0].mxu0
      %1422 = vmatprep.mubr.f32.mxu0 0.0
      %1423 = vmatmul.mubr.f32.gmra.mrb[0].mxu0 %v1205
      %v1424 = vpop.f32.mrb[0].mxu0
      %v1425 = vadd.f32 %v1114, %v1424
      %v1426 = vpop.f32.mrb[0].mxu0
      %1427 = vmatprep.mubr.f32.mxu0 0.0
      %1428 = vmatmul.mubr.f32.gmra.mrb[0].mxu0 %v1208
      %v1429 = vpop.f32.mrb[0].mxu0
      %v1430 = vadd.f32 %v1114, %v1429
      %v1431 = vpop.f32.mrb[0].mxu0
      %1432 = vmatprep.mubr.f32.mxu0 0.0
      %1433 = vmatmul.mubr.f32.gmra.mrb[0].mxu0 %v1211
      %v1434 = vpop.f32.mrb[0].mxu0
      %v1435 = vadd.f32 %v1114, %v1434
      %v1436 = vpop.f32.mrb[0].mxu0
      %1437 = vdwg.mxu0
      %v1438 = vmax.f32 %v1280, 0.0
      %v1439 = vmax.f32 %v1285, 0.0
      %v1440 = vmax.f32 %v1290, 0.0
      %v1441 = vmax.f32 %v1295, 0.0
      %v1442 = vmax.f32 %v1300, 0.0
      %v1443 = vmax.f32 %v1305, 0.0
      %v1444 = vmax.f32 %v1310, 0.0
      %v1445 = vmax.f32 %v1315, 0.0
      %v1446 = vmax.f32 %v1320, 0.0
      %v1447 = vmax.f32 %v1325, 0.0
      %v1448 = vmax.f32 %v1330, 0.0
      %v1449 = vmax.f32 %v1335, 0.0
      %v1450 = vmax.f32 %v1340, 0.0
      %v1451 = vmax.f32 %v1345, 0.0
      %v1452 = vmax.f32 %v1350, 0.0
      %v1453 = vmax.f32 %v1355, 0.0
      %v1454 = vmax.f32 %v1360, 0.0
      %v1455 = vmax.f32 %v1365, 0.0
      %v1456 = vmax.f32 %v1370, 0.0
      %v1457 = vmax.f32 %v1375, 0.0
      %v1458 = vmax.f32 %v1380, 0.0
      %v1459 = vmax.f32 %v1385, 0.0
      %v1460 = vmax.f32 %v1390, 0.0
      %v1461 = vmax.f32 %v1395, 0.0
      %v1462 = vmax.f32 %v1400, 0.0
      %v1463 = vmax.f32 %v1405, 0.0
      %v1464 = vmax.f32 %v1410, 0.0
      %v1465 = vmax.f32 %v1415, 0.0
      %v1466 = vmax.f32 %v1420, 0.0
      %v1467 = vmax.f32 %v1425, 0.0
      %v1468 = vmax.f32 %v1430, 0.0
      %v1469 = vmax.f32 %v1435, 0.0
      %v1470 = vld [vmem:[%s7] sm:$0xff]
      %v1471 = vld [vmem:[%s7 + $0x8] sm:$0xff]
      %v1472 = vld [vmem:[%s7 + $0x10] sm:$0xff]
      %v1473 = vld [vmem:[%s7 + $0x18] sm:$0xff]
      %v1474 = vld [vmem:[%s8] sm:$0x1]
      %v1476 = vlaneseq
      %v1477 = vshrl.u32 %v1476, 7
      %v1478 = vsub.s32 0, %v1477
      %v1479 = vrot.slane %v1474, %v1478
      %v1482 = vsel %vm747, %v1438, 0
      %v1485 = vsel %vm747, %v1439, 0
      %v1488 = vsel %vm747, %v1440, 0
      %v1491 = vsel %vm747, %v1441, 0
      %v1494 = vsel %vm747, %v1442, 0
      %v1497 = vsel %vm747, %v1443, 0
      %v1500 = vsel %vm747, %v1444, 0
      %v1503 = vsel %vm747, %v1445, 0
      %v1506 = vsel %vm747, %v1446, 0
      %v1509 = vsel %vm747, %v1447, 0
      %v1512 = vsel %vm747, %v1448, 0
      %v1515 = vsel %vm747, %v1449, 0
      %v1518 = vsel %vm747, %v1450, 0
      %v1521 = vsel %vm747, %v1451, 0
      %v1524 = vsel %vm747, %v1452, 0
      %v1527 = vsel %vm747, %v1453, 0
      %v1530 = vsel %vm747, %v1454, 0
      %v1533 = vsel %vm747, %v1455, 0
      %v1536 = vsel %vm747, %v1456, 0
      %v1539 = vsel %vm747, %v1457, 0
      %v1542 = vsel %vm747, %v1458, 0
      %v1545 = vsel %vm747, %v1459, 0
      %v1548 = vsel %vm747, %v1460, 0
      %v1551 = vsel %vm747, %v1461, 0
      %v1554 = vsel %vm747, %v1462, 0
      %v1557 = vsel %vm747, %v1463, 0
      %v1560 = vsel %vm747, %v1464, 0
      %v1563 = vsel %vm747, %v1465, 0
      %v1566 = vsel %vm747, %v1466, 0
      %v1569 = vsel %vm747, %v1467, 0
      %v1572 = vsel %vm747, %v1468, 0
      %v1575 = vsel %vm747, %v1469, 0
      %1577 = vmatprep.subr.mxu0 0.0
      %1578 = vmatpush1.msra.mxu0 %v1470
      %1579 = vmatprep.subr.mxu0 0.0
      %1580 = vmatpush1.msra.mxu0 %v1471
      %1581 = vmatprep.subr.mxu0 0.0
      %1582 = vmatpush1.msra.mxu0 %v1472
      %1583 = vmatprep.subr.mxu0 0.0
      %1584 = vmatpush1.msra.mxu0 %v1473
      %1585 = vmatprep.subr.mxu0 0.0
      %1586 = vmatpush1.msra.mxu0 0.0
      %1587 = vmatprep.subr.mxu0 0.0
      %1588 = vmatpush1.msra.mxu0 0.0
      %1589 = vmatprep.subr.mxu0 0.0
      %1590 = vmatpush1.msra.mxu0 0.0
      %1591 = vmatprep.subr.mxu0 0.0
      %1592 = vmatpush1.msra.mxu0 0.0
      %1593 = vmatprep.subr.mxu0 0.0
      %1594 = vmatpush1.msra.mxu0 0.0
      %1595 = vmatprep.subr.mxu0 0.0
      %1596 = vmatpush1.msra.mxu0 0.0
      %1597 = vmatprep.subr.mxu0 0.0
      %1598 = vmatpush1.msra.mxu0 0.0
      %1599 = vmatprep.subr.mxu0 0.0
      %1600 = vmatpush1.msra.mxu0 0.0
      %1601 = vmatprep.subr.mxu0 0.0
      %1602 = vmatpush1.msra.mxu0 0.0
      %1603 = vmatprep.subr.mxu0 0.0
      %1604 = vmatpush1.msra.mxu0 0.0
      %1605 = vmatprep.subr.mxu0 0.0
      %1606 = vmatpush1.msra.mxu0 0.0
      %1607 = vmatprep.subr.mxu0 0.0
      %1608 = vmatpush1.msra.mxu0 0.0
      %1609 = vmatprep.subr.mxu0 0.0
      %1610 = vmatpush1.msra.mxu0 0.0
      %1611 = vmatprep.subr.mxu0 0.0
      %1612 = vmatpush1.msra.mxu0 0.0
      %1613 = vmatprep.subr.mxu0 0.0
      %1614 = vmatpush1.msra.mxu0 0.0
      %1615 = vmatprep.subr.mxu0 0.0
      %1616 = vmatpush1.msra.mxu0 0.0
      %1617 = vmatprep.subr.mxu0 0.0
      %1618 = vmatpush1.msra.mxu0 0.0
      %1619 = vmatprep.subr.mxu0 0.0
      %1620 = vmatpush1.msra.mxu0 0.0
      %1621 = vmatprep.subr.mxu0 0.0
      %1622 = vmatpush1.msra.mxu0 0.0
      %1623 = vmatprep.subr.mxu0 0.0
      %1624 = vmatpush1.msra.mxu0 0.0
      %1625 = vmatprep.subr.mxu0 0.0
      %1626 = vmatpush1.msra.mxu0 0.0
      %1627 = vmatprep.subr.mxu0 0.0
      %1628 = vmatpush1.msra.mxu0 0.0
      %1629 = vmatprep.subr.mxu0 0.0
      %1630 = vmatpush1.msra.mxu0 0.0
      %1631 = vmatprep.subr.mxu0 0.0
      %1632 = vmatpush1.msra.mxu0 0.0
      %1633 = vmatprep.subr.mxu0 0.0
      %1634 = vmatpush1.msra.mxu0 0.0
      %1635 = vmatprep.subr.mxu0 0.0
      %1636 = vmatpush1.msra.mxu0 0.0
      %1637 = vmatprep.subr.mxu0 0.0
      %1638 = vmatpush1.msra.mxu0 0.0
      %1639 = vmatprep.subr.mxu0 0.0
      %1640 = vmatpush1.msra.mxu0 0.0
      %1641 = vmatprep.mubr.f32.mxu0 0.0
      %1642 = vmatmul.mubr.f32.gmra.mrb[0].mxu0 %v1482
      %v1643 = vpop.f32.mrb[0].mxu0
      %v1644 = vadd.f32 %v1479, %v1643
      %v1645 = vpop.f32.mrb[0].mxu0
      %1646 = vmatprep.mubr.f32.mxu0 0.0
      %1647 = vmatmul.mubr.f32.gmra.mrb[0].mxu0 %v1485
      %v1648 = vpop.f32.mrb[0].mxu0
      %v1649 = vadd.f32 %v1479, %v1648
      %v1650 = vpop.f32.mrb[0].mxu0
      %1651 = vmatprep.mubr.f32.mxu0 0.0
      %1652 = vmatmul.mubr.f32.gmra.mrb[0].mxu0 %v1488
      %v1653 = vpop.f32.mrb[0].mxu0
      %v1654 = vadd.f32 %v1479, %v1653
      %v1655 = vpop.f32.mrb[0].mxu0
      %1656 = vmatprep.mubr.f32.mxu0 0.0
      %1657 = vmatmul.mubr.f32.gmra.mrb[0].mxu0 %v1491
      %v1658 = vpop.f32.mrb[0].mxu0
      %v1659 = vadd.f32 %v1479, %v1658
      %v1660 = vpop.f32.mrb[0].mxu0
      %1661 = vmatprep.mubr.f32.mxu0 0.0
      %1662 = vmatmul.mubr.f32.gmra.mrb[0].mxu0 %v1494
      %v1663 = vpop.f32.mrb[0].mxu0
      %v1664 = vadd.f32 %v1479, %v1663
      %v1665 = vpop.f32.mrb[0].mxu0
      %1666 = vmatprep.mubr.f32.mxu0 0.0
      %1667 = vmatmul.mubr.f32.gmra.mrb[0].mxu0 %v1497
      %v1668 = vpop.f32.mrb[0].mxu0
      %v1669 = vadd.f32 %v1479, %v1668
      %v1670 = vpop.f32.mrb[0].mxu0
      %1671 = vmatprep.mubr.f32.mxu0 0.0
      %1672 = vmatmul.mubr.f32.gmra.mrb[0].mxu0 %v1500
      %v1673 = vpop.f32.mrb[0].mxu0
      %v1674 = vadd.f32 %v1479, %v1673
      %v1675 = vpop.f32.mrb[0].mxu0
      %1676 = vmatprep.mubr.f32.mxu0 0.0
      %1677 = vmatmul.mubr.f32.gmra.mrb[0].mxu0 %v1503
      %v1678 = vpop.f32.mrb[0].mxu0
      %v1679 = vadd.f32 %v1479, %v1678
      %v1680 = vpop.f32.mrb[0].mxu0
      %1681 = vmatprep.mubr.f32.mxu0 0.0
      %1682 = vmatmul.mubr.f32.gmra.mrb[0].mxu0 %v1506
      %v1683 = vpop.f32.mrb[0].mxu0
      %v1684 = vadd.f32 %v1479, %v1683
      %v1685 = vpop.f32.mrb[0].mxu0
      %1686 = vmatprep.mubr.f32.mxu0 0.0
      %1687 = vmatmul.mubr.f32.gmra.mrb[0].mxu0 %v1509
      %v1688 = vpop.f32.mrb[0].mxu0
      %v1689 = vadd.f32 %v1479, %v1688
      %v1690 = vpop.f32.mrb[0].mxu0
      %1691 = vmatprep.mubr.f32.mxu0 0.0
      %1692 = vmatmul.mubr.f32.gmra.mrb[0].mxu0 %v1512
      %v1693 = vpop.f32.mrb[0].mxu0
      %v1694 = vadd.f32 %v1479, %v1693
      %v1695 = vpop.f32.mrb[0].mxu0
      %1696 = vmatprep.mubr.f32.mxu0 0.0
      %1697 = vmatmul.mubr.f32.gmra.mrb[0].mxu0 %v1515
      %v1698 = vpop.f32.mrb[0].mxu0
      %v1699 = vadd.f32 %v1479, %v1698
      %v1700 = vpop.f32.mrb[0].mxu0
      %1701 = vmatprep.mubr.f32.mxu0 0.0
      %1702 = vmatmul.mubr.f32.gmra.mrb[0].mxu0 %v1518
      %v1703 = vpop.f32.mrb[0].mxu0
      %v1704 = vadd.f32 %v1479, %v1703
      %v1705 = vpop.f32.mrb[0].mxu0
      %1706 = vmatprep.mubr.f32.mxu0 0.0
      %1707 = vmatmul.mubr.f32.gmra.mrb[0].mxu0 %v1521
      %v1708 = vpop.f32.mrb[0].mxu0
      %v1709 = vadd.f32 %v1479, %v1708
      %v1710 = vpop.f32.mrb[0].mxu0
      %1711 = vmatprep.mubr.f32.mxu0 0.0
      %1712 = vmatmul.mubr.f32.gmra.mrb[0].mxu0 %v1524
      %v1713 = vpop.f32.mrb[0].mxu0
      %v1714 = vadd.f32 %v1479, %v1713
      %v1715 = vpop.f32.mrb[0].mxu0
      %1716 = vmatprep.mubr.f32.mxu0 0.0
      %1717 = vmatmul.mubr.f32.gmra.mrb[0].mxu0 %v1527
      %v1718 = vpop.f32.mrb[0].mxu0
      %v1719 = vadd.f32 %v1479, %v1718
      %v1720 = vpop.f32.mrb[0].mxu0
      %1721 = vmatprep.mubr.f32.mxu0 0.0
      %1722 = vmatmul.mubr.f32.gmra.mrb[0].mxu0 %v1530
      %v1723 = vpop.f32.mrb[0].mxu0
      %v1724 = vadd.f32 %v1479, %v1723
      %v1725 = vpop.f32.mrb[0].mxu0
      %1726 = vmatprep.mubr.f32.mxu0 0.0
      %1727 = vmatmul.mubr.f32.gmra.mrb[0].mxu0 %v1533
      %v1728 = vpop.f32.mrb[0].mxu0
      %v1729 = vadd.f32 %v1479, %v1728
      %v1730 = vpop.f32.mrb[0].mxu0
      %1731 = vmatprep.mubr.f32.mxu0 0.0
      %1732 = vmatmul.mubr.f32.gmra.mrb[0].mxu0 %v1536
      %v1733 = vpop.f32.mrb[0].mxu0
      %v1734 = vadd.f32 %v1479, %v1733
      %v1735 = vpop.f32.mrb[0].mxu0
      %1736 = vmatprep.mubr.f32.mxu0 0.0
      %1737 = vmatmul.mubr.f32.gmra.mrb[0].mxu0 %v1539
      %v1738 = vpop.f32.mrb[0].mxu0
      %v1739 = vadd.f32 %v1479, %v1738
      %v1740 = vpop.f32.mrb[0].mxu0
      %1741 = vmatprep.mubr.f32.mxu0 0.0
      %1742 = vmatmul.mubr.f32.gmra.mrb[0].mxu0 %v1542
      %v1743 = vpop.f32.mrb[0].mxu0
      %v1744 = vadd.f32 %v1479, %v1743
      %v1745 = vpop.f32.mrb[0].mxu0
      %1746 = vmatprep.mubr.f32.mxu0 0.0
      %1747 = vmatmul.mubr.f32.gmra.mrb[0].mxu0 %v1545
      %v1748 = vpop.f32.mrb[0].mxu0
      %v1749 = vadd.f32 %v1479, %v1748
      %v1750 = vpop.f32.mrb[0].mxu0
      %1751 = vmatprep.mubr.f32.mxu0 0.0
      %1752 = vmatmul.mubr.f32.gmra.mrb[0].mxu0 %v1548
      %v1753 = vpop.f32.mrb[0].mxu0
      %v1754 = vadd.f32 %v1479, %v1753
      %v1755 = vpop.f32.mrb[0].mxu0
      %1756 = vmatprep.mubr.f32.mxu0 0.0
      %1757 = vmatmul.mubr.f32.gmra.mrb[0].mxu0 %v1551
      %v1758 = vpop.f32.mrb[0].mxu0
      %v1759 = vadd.f32 %v1479, %v1758
      %v1760 = vpop.f32.mrb[0].mxu0
      %1761 = vmatprep.mubr.f32.mxu0 0.0
      %1762 = vmatmul.mubr.f32.gmra.mrb[0].mxu0 %v1554
      %v1763 = vpop.f32.mrb[0].mxu0
      %v1764 = vadd.f32 %v1479, %v1763
      %v1765 = vpop.f32.mrb[0].mxu0
      %1766 = vmatprep.mubr.f32.mxu0 0.0
      %1767 = vmatmul.mubr.f32.gmra.mrb[0].mxu0 %v1557
      %v1768 = vpop.f32.mrb[0].mxu0
      %v1769 = vadd.f32 %v1479, %v1768
      %v1770 = vpop.f32.mrb[0].mxu0
      %1771 = vmatprep.mubr.f32.mxu0 0.0
      %1772 = vmatmul.mubr.f32.gmra.mrb[0].mxu0 %v1560
      %v1773 = vpop.f32.mrb[0].mxu0
      %v1774 = vadd.f32 %v1479, %v1773
      %v1775 = vpop.f32.mrb[0].mxu0
      %1776 = vmatprep.mubr.f32.mxu0 0.0
      %1777 = vmatmul.mubr.f32.gmra.mrb[0].mxu0 %v1563
      %v1778 = vpop.f32.mrb[0].mxu0
      %v1779 = vadd.f32 %v1479, %v1778
      %v1780 = vpop.f32.mrb[0].mxu0
      %1781 = vmatprep.mubr.f32.mxu0 0.0
      %1782 = vmatmul.mubr.f32.gmra.mrb[0].mxu0 %v1566
      %v1783 = vpop.f32.mrb[0].mxu0
      %v1784 = vadd.f32 %v1479, %v1783
      %v1785 = vpop.f32.mrb[0].mxu0
      %1786 = vmatprep.mubr.f32.mxu0 0.0
      %1787 = vmatmul.mubr.f32.gmra.mrb[0].mxu0 %v1569
      %v1788 = vpop.f32.mrb[0].mxu0
      %v1789 = vadd.f32 %v1479, %v1788
      %v1790 = vpop.f32.mrb[0].mxu0
      %1791 = vmatprep.mubr.f32.mxu0 0.0
      %1792 = vmatmul.mubr.f32.gmra.mrb[0].mxu0 %v1572
      %v1793 = vpop.f32.mrb[0].mxu0
      %v1794 = vadd.f32 %v1479, %v1793
      %v1795 = vpop.f32.mrb[0].mxu0
      %1796 = vmatprep.mubr.f32.mxu0 0.0
      %1797 = vmatmul.mubr.f32.gmra.mrb[0].mxu0 %v1575
      %v1798 = vpop.f32.mrb[0].mxu0
      %v1799 = vadd.f32 %v1479, %v1798
      %v1800 = vpop.f32.mrb[0].mxu0
      %1801 = vdwg.mxu0
      %v1802 = vsub.f32 0.0, %v1644
      %v1803 = vsub.f32 0.0, %v1649
      %v1804 = vsub.f32 0.0, %v1654
      %v1805 = vsub.f32 0.0, %v1659
      %v1806 = vsub.f32 0.0, %v1664
      %v1807 = vsub.f32 0.0, %v1669
      %v1808 = vsub.f32 0.0, %v1674
      %v1809 = vsub.f32 0.0, %v1679
      %v1810 = vsub.f32 0.0, %v1684
      %v1811 = vsub.f32 0.0, %v1689
      %v1812 = vsub.f32 0.0, %v1694
      %v1813 = vsub.f32 0.0, %v1699
      %v1814 = vsub.f32 0.0, %v1704
      %v1815 = vsub.f32 0.0, %v1709
      %v1816 = vsub.f32 0.0, %v1714
      %v1817 = vsub.f32 0.0, %v1719
      %v1818 = vsub.f32 0.0, %v1724
      %v1819 = vsub.f32 0.0, %v1729
      %v1820 = vsub.f32 0.0, %v1734
      %v1821 = vsub.f32 0.0, %v1739
      %v1822 = vsub.f32 0.0, %v1744
      %v1823 = vsub.f32 0.0, %v1749
      %v1824 = vsub.f32 0.0, %v1754
      %v1825 = vsub.f32 0.0, %v1759
      %v1826 = vsub.f32 0.0, %v1764
      %v1827 = vsub.f32 0.0, %v1769
      %v1828 = vsub.f32 0.0, %v1774
      %v1829 = vsub.f32 0.0, %v1779
      %v1830 = vsub.f32 0.0, %v1784
      %v1831 = vsub.f32 0.0, %v1789
      %v1832 = vsub.f32 0.0, %v1794
      %v1833 = vsub.f32 0.0, %v1799
      %v1834 = vmul.f32 %v1802, 1.442695
      %v1835 = vpow.pop %v1834
      %v1836 = vmul.f32 %v1803, 1.442695
      %v1837 = vpow.pop %v1836
      %v1838 = vmul.f32 %v1804, 1.442695
      %v1839 = vpow.pop %v1838
      %v1840 = vmul.f32 %v1805, 1.442695
      %v1841 = vpow.pop %v1840
      %v1842 = vmul.f32 %v1806, 1.442695
      %v1843 = vpow.pop %v1842
      %v1844 = vmul.f32 %v1807, 1.442695
      %v1845 = vpow.pop %v1844
      %v1846 = vmul.f32 %v1808, 1.442695
      %v1847 = vpow.pop %v1846
      %v1848 = vmul.f32 %v1809, 1.442695
      %v1849 = vpow.pop %v1848
      %v1850 = vmul.f32 %v1810, 1.442695
      %v1851 = vpow.pop %v1850
      %v1852 = vmul.f32 %v1811, 1.442695
      %v1853 = vpow.pop %v1852
      %v1854 = vmul.f32 %v1812, 1.442695
      %v1855 = vpow.pop %v1854
      %v1856 = vmul.f32 %v1813, 1.442695
      %v1857 = vpow.pop %v1856
      %v1858 = vmul.f32 %v1814, 1.442695
      %v1859 = vpow.pop %v1858
      %v1860 = vmul.f32 %v1815, 1.442695
      %v1861 = vpow.pop %v1860
      %v1862 = vmul.f32 %v1816, 1.442695
      %v1863 = vpow.pop %v1862
      %v1864 = vmul.f32 %v1817, 1.442695
      %v1865 = vpow.pop %v1864
      %v1866 = vmul.f32 %v1818, 1.442695
      %v1867 = vpow.pop %v1866
      %v1868 = vmul.f32 %v1819, 1.442695
      %v1869 = vpow.pop %v1868
      %v1870 = vmul.f32 %v1820, 1.442695
      %v1871 = vpow.pop %v1870
      %v1872 = vmul.f32 %v1821, 1.442695
      %v1873 = vpow.pop %v1872
      %v1874 = vmul.f32 %v1822, 1.442695
      %v1875 = vpow.pop %v1874
      %v1876 = vmul.f32 %v1823, 1.442695
      %v1877 = vpow.pop %v1876
      %v1878 = vmul.f32 %v1824, 1.442695
      %v1879 = vpow.pop %v1878
      %v1880 = vmul.f32 %v1825, 1.442695
      %v1881 = vpow.pop %v1880
      %v1882 = vmul.f32 %v1826, 1.442695
      %v1883 = vpow.pop %v1882
      %v1884 = vmul.f32 %v1827, 1.442695
      %v1885 = vpow.pop %v1884
      %v1886 = vmul.f32 %v1828, 1.442695
      %v1887 = vpow.pop %v1886
      %v1888 = vmul.f32 %v1829, 1.442695
      %v1889 = vpow.pop %v1888
      %v1890 = vmul.f32 %v1830, 1.442695
      %v1891 = vpow.pop %v1890
      %v1892 = vmul.f32 %v1831, 1.442695
      %v1893 = vpow.pop %v1892
      %v1894 = vmul.f32 %v1832, 1.442695
      %v1895 = vpow.pop %v1894
      %v1896 = vmul.f32 %v1833, 1.442695
      %v1897 = vpow.pop %v1896
      %v1898 = vadd.f32 %v1835, 1.0
      %v1899 = vadd.f32 %v1837, 1.0
      %v1900 = vadd.f32 %v1839, 1.0
      %v1901 = vadd.f32 %v1841, 1.0
      %v1902 = vadd.f32 %v1843, 1.0
      %v1903 = vadd.f32 %v1845, 1.0
      %v1904 = vadd.f32 %v1847, 1.0
      %v1905 = vadd.f32 %v1849, 1.0
      %v1906 = vadd.f32 %v1851, 1.0
      %v1907 = vadd.f32 %v1853, 1.0
      %v1908 = vadd.f32 %v1855, 1.0
      %v1909 = vadd.f32 %v1857, 1.0
      %v1910 = vadd.f32 %v1859, 1.0
      %v1911 = vadd.f32 %v1861, 1.0
      %v1912 = vadd.f32 %v1863, 1.0
      %v1913 = vadd.f32 %v1865, 1.0
      %v1914 = vadd.f32 %v1867, 1.0
      %v1915 = vadd.f32 %v1869, 1.0
      %v1916 = vadd.f32 %v1871, 1.0
      %v1917 = vadd.f32 %v1873, 1.0
      %v1918 = vadd.f32 %v1875, 1.0
      %v1919 = vadd.f32 %v1877, 1.0
      %v1920 = vadd.f32 %v1879, 1.0
      %v1921 = vadd.f32 %v1881, 1.0
      %v1922 = vadd.f32 %v1883, 1.0
      %v1923 = vadd.f32 %v1885, 1.0
      %v1924 = vadd.f32 %v1887, 1.0
      %v1925 = vadd.f32 %v1889, 1.0
      %v1926 = vadd.f32 %v1891, 1.0
      %v1927 = vadd.f32 %v1893, 1.0
      %v1928 = vadd.f32 %v1895, 1.0
      %v1929 = vadd.f32 %v1897, 1.0
      %v1930 = vrcp.pop %v1898
      %v1931 = vmul.f32 1.0, %v1930
      %v1932 = vrcp.pop %v1899
      %v1933 = vmul.f32 1.0, %v1932
      %v1934 = vrcp.pop %v1900
      %v1935 = vmul.f32 1.0, %v1934
      %v1936 = vrcp.pop %v1901
      %v1937 = vmul.f32 1.0, %v1936
      %v1938 = vrcp.pop %v1902
      %v1939 = vmul.f32 1.0, %v1938
      %v1940 = vrcp.pop %v1903
      %v1941 = vmul.f32 1.0, %v1940
      %v1942 = vrcp.pop %v1904
      %v1943 = vmul.f32 1.0, %v1942
      %v1944 = vrcp.pop %v1905
      %v1945 = vmul.f32 1.0, %v1944
      %v1946 = vrcp.pop %v1906
      %v1947 = vmul.f32 1.0, %v1946
      %v1948 = vrcp.pop %v1907
      %v1949 = vmul.f32 1.0, %v1948
      %v1950 = vrcp.pop %v1908
      %v1951 = vmul.f32 1.0, %v1950
      %v1952 = vrcp.pop %v1909
      %v1953 = vmul.f32 1.0, %v1952
      %v1954 = vrcp.pop %v1910
      %v1955 = vmul.f32 1.0, %v1954
      %v1956 = vrcp.pop %v1911
      %v1957 = vmul.f32 1.0, %v1956
      %v1958 = vrcp.pop %v1912
      %v1959 = vmul.f32 1.0, %v1958
      %v1960 = vrcp.pop %v1913
      %v1961 = vmul.f32 1.0, %v1960
      %v1962 = vrcp.pop %v1914
      %v1963 = vmul.f32 1.0, %v1962
      %v1964 = vrcp.pop %v1915
      %v1965 = vmul.f32 1.0, %v1964
      %v1966 = vrcp.pop %v1916
      %v1967 = vmul.f32 1.0, %v1966
      %v1968 = vrcp.pop %v1917
      %v1969 = vmul.f32 1.0, %v1968
      %v1970 = vrcp.pop %v1918
      %v1971 = vmul.f32 1.0, %v1970
      %v1972 = vrcp.pop %v1919
      %v1973 = vmul.f32 1.0, %v1972
      %v1974 = vrcp.pop %v1920
      %v1975 = vmul.f32 1.0, %v1974
      %v1976 = vrcp.pop %v1921
      %v1977 = vmul.f32 1.0, %v1976
      %v1978 = vrcp.pop %v1922
      %v1979 = vmul.f32 1.0, %v1978
      %v1980 = vrcp.pop %v1923
      %v1981 = vmul.f32 1.0, %v1980
      %v1982 = vrcp.pop %v1924
      %v1983 = vmul.f32 1.0, %v1982
      %v1984 = vrcp.pop %v1925
      %v1985 = vmul.f32 1.0, %v1984
      %v1986 = vrcp.pop %v1926
      %v1987 = vmul.f32 1.0, %v1986
      %v1988 = vrcp.pop %v1927
      %v1989 = vmul.f32 1.0, %v1988
      %v1990 = vrcp.pop %v1928
      %v1991 = vmul.f32 1.0, %v1990
      %v1992 = vrcp.pop %v1929
      %v1993 = vmul.f32 1.0, %v1992
      %vm1994 = vcmask 15360
      %1995 = vst.msk [vmem:[%s334] sm:$0xff] %vm1994, %v1931
      %1996 = vst.msk [vmem:[%s334 + $0x8] sm:$0xff] %vm1994, %v1933
      %1997 = vst.msk [vmem:[%s334 + $0x10] sm:$0xff] %vm1994, %v1935
      %1998 = vst.msk [vmem:[%s334 + $0x18] sm:$0xff] %vm1994, %v1937
      %1999 = vst.msk [vmem:[%s334 + $0x20] sm:$0xff] %vm1994, %v1939
      %2000 = vst.msk [vmem:[%s334 + $0x28] sm:$0xff] %vm1994, %v1941
      %2001 = vst.msk [vmem:[%s334 + $0x30] sm:$0xff] %vm1994, %v1943
      %2002 = vst.msk [vmem:[%s334 + $0x38] sm:$0xff] %vm1994, %v1945
      %2003 = vst.msk [vmem:[%s334 + $0x40] sm:$0xff] %vm1994, %v1947
      %2004 = vst.msk [vmem:[%s334 + $0x48] sm:$0xff] %vm1994, %v1949
      %2005 = vst.msk [vmem:[%s334 + $0x50] sm:$0xff] %vm1994, %v1951
      %2006 = vst.msk [vmem:[%s334 + $0x58] sm:$0xff] %vm1994, %v1953
      %2007 = vst.msk [vmem:[%s334 + $0x60] sm:$0xff] %vm1994, %v1955
      %2008 = vst.msk [vmem:[%s334 + $0x68] sm:$0xff] %vm1994, %v1957
      %2009 = vst.msk [vmem:[%s334 + $0x70] sm:$0xff] %vm1994, %v1959
      %2010 = vst.msk [vmem:[%s334 + $0x78] sm:$0xff] %vm1994, %v1961
      %2011 = vst.msk [vmem:[%s334 + $0x80] sm:$0xff] %vm1994, %v1963
      %2012 = vst.msk [vmem:[%s334 + $0x88] sm:$0xff] %vm1994, %v1965
      %2013 = vst.msk [vmem:[%s334 + $0x90] sm:$0xff] %vm1994, %v1967
      %2014 = vst.msk [vmem:[%s334 + $0x98] sm:$0xff] %vm1994, %v1969
      %2015 = vst.msk [vmem:[%s334 + $0xa0] sm:$0xff] %vm1994, %v1971
      %2016 = vst.msk [vmem:[%s334 + $0xa8] sm:$0xff] %vm1994, %v1973
      %2017 = vst.msk [vmem:[%s334 + $0xb0] sm:$0xff] %vm1994, %v1975
      %2018 = vst.msk [vmem:[%s334 + $0xb8] sm:$0xff] %vm1994, %v1977
      %2019 = vst.msk [vmem:[%s334 + $0xc0] sm:$0xff] %vm1994, %v1979
      %2020 = vst.msk [vmem:[%s334 + $0xc8] sm:$0xff] %vm1994, %v1981
      %2021 = vst.msk [vmem:[%s334 + $0xd0] sm:$0xff] %vm1994, %v1983
      %2022 = vst.msk [vmem:[%s334 + $0xd8] sm:$0xff] %vm1994, %v1985
      %2023 = vst.msk [vmem:[%s334 + $0xe0] sm:$0xff] %vm1994, %v1987
      %2024 = vst.msk [vmem:[%s334 + $0xe8] sm:$0xff] %vm1994, %v1989
      %2025 = vst.msk [vmem:[%s334 + $0xf0] sm:$0xff] %vm1994, %v1991
      %2026 = vst.msk [vmem:[%s334 + $0xf8] sm:$0xff] %vm1994, %v1993
      %s2027 = smul.u32 32, %s20
      %p2028 = scmp.lt.s32.totalorder %s2027, 127
      %s2029 = scalar_select %p2028, %s2027, 127
      %s2030 = smul.addr %s2029, 8
      %s2031 = scalar_lea.vmem %s9, %s2030
      // Predicated region
      $region57: #{dqn_forward.1} parent=55 // pred_check
        %p2032 = pneg %p232
      $region58: #{dqn_forward.1} parent=55 // pred_check_branch
        %2034 = sbr.rel (%p2032) target = $region60
      $region59: #{dqn_forward.1} parent=55 // pred_region
        %s2035 = smul.u32 32, %s20
      $region60: #{dqn_forward.1} parent=55 // pred_fallthru
        _
    $region56: #{dqn_forward.1} parent=5 // pred_fallthru
      _
    %p2036 = scmp.le.s32.totalorder 2, %s15
    // Predicated region
    $region61: #{dqn_forward.1} parent=5 // pred_check
      %p2037 = pneg %p2036
    $region62: #{dqn_forward.1} parent=5 // pred_check_branch
      %2039 = sbr.rel (%p2037) target = $region64
    $region63: #{dqn_forward.1} parent=5 // pred_region
      %s2040 = ssub.s32 %s15, 2
      // Predicated region
      $region65: #{dqn_forward.1} parent=63 // pred_check
        %p2041 = pneg %p238
      $region66: #{dqn_forward.1} parent=63 // pred_check_branch
        %2043 = sbr.rel (%p2041) target = $region68
      $region67: #{dqn_forward.1} parent=63 // pred_region
        %s2044 = smul.u32 32, %s21
        %p2045 = scmp.lt.s32.totalorder %s2044, 127
        %s2046 = scalar_select %p2045, %s2044, 127
        %s2047 = smul.addr %s2046, 8
        %s2048 = scalar_lea.vmem %s9, %s2047
      $region68: #{dqn_forward.1} parent=63 // pred_fallthru
        _
    $region64: #{dqn_forward.1} parent=5 // pred_fallthru
      _
  $region6: #{dqn_forward.1} parent=0 // loop_footer
    %s19 = sadd.s32 1, %s15
  $region7: #{dqn_forward.1} parent=0 // loop_footer_branch
    %14 = sbr.rel target = $region3
  $region8: #{dqn_forward.1} parent=0 // loop_exit
    _

</llo_original>
